<compile_context>
chip_gen: v7x
topology: tpu7x:2x2x1
jax: 0.10.0
libtpu: 0.0.40
codegen_flags: <defaults>
</compile_context>

<pallas_src>
import functools
import math

import jax
import jax.numpy as jnp
from jax.experimental import pallas as pl
from jax.experimental.pallas import tpu as pltpu


# ---------------------------------------------------------------------------
# Kernel 1: fused q/k/v projection.
#   grid = (n_heads,)  ("parallel" -> both TensorCores on v7x).
#   The x block index is constant across steps so it is DMA'd once; each step
#   reads one head's slice of the three pre-laid-out projection weights and
#   writes lane-dense (B, L*dk) / (B, dk*L) / (B, dv*L) output tiles.
# ---------------------------------------------------------------------------
def _qkv_proj_kernel(x_ref, wq_ref, wk_ref, wv_ref, q_ref, k_ref, v_ref):
    x = x_ref[...]                                              # (B, in_dim)
    q_ref[...] = jnp.dot(x, wq_ref[0],
                         preferred_element_type=jnp.float32).astype(q_ref.dtype)
    k_ref[...] = jnp.dot(x, wk_ref[0],
                         preferred_element_type=jnp.float32).astype(k_ref.dtype)
    v_ref[...] = jnp.dot(x, wv_ref[0],
                         preferred_element_type=jnp.float32).astype(v_ref.dtype)


def fused_qkv_projection(xf, wq_rt, wk_t, wv_t):
    """xf: (B, in_dim); w*_t: (nh, in_dim, out_per_head). Returns three (B, nh*out) arrays."""
    B, in_dim = xf.shape
    nh, _, qw = wq_rt.shape
    kw = wk_t.shape[2]
    vw = wv_t.shape[2]
    return pl.pallas_call(
        _qkv_proj_kernel,
        grid=(nh,),
        in_specs=[
            pl.BlockSpec((B, in_dim), lambda h: (0, 0)),         # shared, fetched once
            pl.BlockSpec((1, in_dim, qw), lambda h: (h, 0, 0)),
            pl.BlockSpec((1, in_dim, kw), lambda h: (h, 0, 0)),
            pl.BlockSpec((1, in_dim, vw), lambda h: (h, 0, 0)),
        ],
        out_specs=[
            pl.BlockSpec((B, qw), lambda h: (0, h)),
            pl.BlockSpec((B, kw), lambda h: (0, h)),
            pl.BlockSpec((B, vw), lambda h: (0, h)),
        ],
        out_shape=[
            jax.ShapeDtypeStruct((B, nh * qw), jnp.float32),
            jax.ShapeDtypeStruct((B, nh * kw), jnp.float32),
            jax.ShapeDtypeStruct((B, nh * vw), jnp.float32),
        ],
        compiler_params=pltpu.CompilerParams(dimension_semantics=("parallel",)),
    )(xf, wq_rt, wk_t, wv_t)


# ---------------------------------------------------------------------------
# Kernel 2: attention + out_proj, fused.
#   grid = (B,)  ("parallel").  All heads of one batch element are handled in
#   a single grid step; ctx stays in registers/VMEM and is matmul'd straight
#   into the block-diagonal out_proj weight, so the only store is a single
#   lane-dense (nh, dv, H*in_dim) tile per step.
# ---------------------------------------------------------------------------
def _attn_outproj_kernel(q_ref, k_ref, v_ref, wo_ref, o_ref, *, n_heads, scale):
    # q: (1, nh, L, dk)   k: (1, nh, dk, L)   v: (1, nh, dv, L)
    # wo: (L, H*in_dim)   o: (1, nh, dv, H*in_dim)
    wo = wo_ref[...]
    for h in range(n_heads):                                     # static unroll (nh is tiny)
        q = q_ref[0, h]                                          # (L, dk)
        k = k_ref[0, h]                                          # (dk, L)
        v = v_ref[0, h]                                          # (dv, L)
        # raw scores — the torch code applies NO pre-softmax scaling
        s = jnp.dot(q, k, preferred_element_type=jnp.float32)    # (L, L)
        m = jnp.max(s, axis=-1, keepdims=True)
        e = jnp.exp(s - m)
        denom = jnp.sum(e, axis=-1, keepdims=True)
        p = e * pl.reciprocal(denom, approx=True)                # softmax (EUP reciprocal)
        # ctx[d, l] = sum_m v[d, m] * p[l, m]; post-softmax /sqrt(k_dim) folded
        # into the smaller (dv, L) tensor instead of the (L, L) probabilities.
        ctx = jax.lax.dot_general(
            v, p, (((1,), (1,)), ((), ())),
            preferred_element_type=jnp.float32) * scale          # (dv, L)
        # fused out_proj: (dv, L) @ (L, H*in_dim) -> lane-dense (dv, H*in_dim)
        o_ref[0, h] = jnp.dot(ctx, wo,
                              preferred_element_type=jnp.float32).astype(o_ref.dtype)


def fused_attention_outproj(q, k, v, wo_big, *, k_dim):
    """q: (B, nh, L, dk), k: (B, nh, dk, L), v: (B, nh, dv, L), wo_big: (L, H*in_dim)."""
    B, nh, L, dk = q.shape
    dv = v.shape[2]
    no = wo_big.shape[1]
    scale = 1.0 / math.sqrt(float(k_dim))
    return pl.pallas_call(
        functools.partial(_attn_outproj_kernel, n_heads=nh, scale=scale),
        grid=(B,),
        in_specs=[
            pl.BlockSpec((1, nh, L, dk), lambda b: (b, 0, 0, 0)),
            pl.BlockSpec((1, nh, dk, L), lambda b: (b, 0, 0, 0)),
            pl.BlockSpec((1, nh, dv, L), lambda b: (b, 0, 0, 0)),
            pl.BlockSpec((L, no), lambda b: (0, 0)),             # fetched once
        ],
        out_specs=pl.BlockSpec((1, nh, dv, no), lambda b: (b, 0, 0, 0)),
        out_shape=jax.ShapeDtypeStruct((B, nh, dv, no), jnp.float32),
        compiler_params=pltpu.CompilerParams(dimension_semantics=("parallel",)),
    )(q, k, v, wo_big)


# ---------------------------------------------------------------------------
# Forward pass.  The only host-side JAX ops are one-time weight re-layouts
# (would be cached alongside the params in practice) and free row-major
# reshapes of activations — no activation transposes, no extra HBM traffic.
# ---------------------------------------------------------------------------
def multi_head_attention(x, params, *, n_heads, k_dim, v_dim):
    B, C, H, W = x.shape
    L = H * W
    in_dim = C * H * W
    assert W == n_heads * v_dim, (
        "out_proj (nn.Linear applied to the last axis of the NCHW tensor) "
        "requires W == n_heads * v_dim, just like the PyTorch code"
    )

    xf = x.reshape(B, in_dim)                                    # torch.flatten(x, 1)

    # ---- one-time weight re-layout (cheap, weights only) -------------------
    wq, wk, wv, wo = params["wq"], params["wk"], params["wv"], params["wo"]
    # Permute wq's rows so the projection output lands directly in (L, dk)
    # per head (this IS q.permute(0,1,3,2) — computed for free at weight prep).
    wq_rt = (wq.reshape(n_heads, k_dim, L, in_dim)
               .transpose(0, 3, 2, 1)                            # (nh, in_dim, L, dk)
               .reshape(n_heads, in_dim, L * k_dim))
    wk_t = wk.reshape(n_heads, k_dim * L, in_dim).transpose(0, 2, 1)   # (nh, in_dim, dk*L)
    wv_t = wv.reshape(n_heads, v_dim * L, in_dim).transpose(0, 2, 1)   # (nh, in_dim, dv*L)
    # out_proj contracts only over the width axis; embed it as a block-diagonal
    # (L, H*in_dim) matrix so it becomes one lane-dense matmul fused into the
    # attention kernel:  Wbig[i*W + w, j*in_dim + o] = (i == j) * wo[o, w].
    eye_h = jnp.eye(H, dtype=wo.dtype)
    wo_big = jnp.einsum("ij,ow->iwjo", eye_h, wo).reshape(L, H * in_dim)

    # ---- kernel 1: fused q/k/v projection ----------------------------------
    q_flat, k_flat, v_flat = fused_qkv_projection(xf, wq_rt, wk_t, wv_t)
    q = q_flat.reshape(B, n_heads, L, k_dim)      # free reshapes, no transposes
    k = k_flat.reshape(B, n_heads, k_dim, L)
    v = v_flat.reshape(B, n_heads, v_dim, L)

    # ---- kernel 2: attention + out_proj ------------------------------------
    out = fused_attention_outproj(q, k, v, wo_big, k_dim=k_dim)  # (B, nh, dv, H*in_dim)
    return out.reshape(B, n_heads * v_dim, H, in_dim)


# ---------------------------------------------------------------------------
# Pure-JAX reference (same semantics), for a correctness check
# ---------------------------------------------------------------------------
def reference_forward(x, params, *, n_heads, k_dim, v_dim):
    HI = jax.lax.Precision.HIGHEST
    B, C, H, W = x.shape
    L = H * W
    in_dim = C * H * W
    xf = x.reshape(B, in_dim)
    q = jnp.einsum("bi,oi->bo", xf, params["wq"], precision=HI)
    k = jnp.einsum("bi,oi->bo", xf, params["wk"], precision=HI)
    v = jnp.einsum("bi,oi->bo", xf, params["wv"], precision=HI)
    q = q.reshape(B, n_heads, k_dim, L).transpose(0, 1, 3, 2)
    k = k.reshape(B, n_heads, k_dim, L)
    v = v.reshape(B, n_heads, v_dim, L)
    scores = jnp.einsum("bnlc,bncm->bnlm", q, k, precision=HI)
    attn = jax.nn.softmax(scores, axis=-1) / jnp.sqrt(jnp.float32(k_dim))
    ctx = jnp.einsum("bnlm,bndm->bndl", attn, v, precision=HI)
    attn_output = ctx.reshape(B, n_heads * v_dim, H, W)
    return jnp.einsum("bchw,ow->bcho", attn_output, params["wo"], precision=HI)


# ---------------------------------------------------------------------------
if __name__ == "__main__":
    B, C, H, W = 2, 2, 4, 8
    n_heads, k_dim, v_dim = 2, 8, 4          # W == n_heads * v_dim (required by out_proj)
    in_dim = C * H * W                        # 64
    L = H * W                                 # 32

    key = jax.random.PRNGKey(0)
    kx, kq, kk, kv, ko = jax.random.split(key, 5)

    def init_linear(k, out_features, in_features):
        bound = 1.0 / math.sqrt(in_features)  # PyTorch nn.Linear default init range
        return jax.random.uniform(
            k, (out_features, in_features), jnp.float32, -bound, bound
        )

    params = {
        "wq": init_linear(kq, n_heads * k_dim * L, in_dim),
        "wk": init_linear(kk, n_heads * k_dim * L, in_dim),
        "wv": init_linear(kv, n_heads * v_dim * L, in_dim),
        "wo": init_linear(ko, in_dim, n_heads * v_dim),
    }

    x = jax.random.normal(kx, (B, C, H, W), jnp.float32)

    fwd = jax.jit(functools.partial(
        multi_head_attention, n_heads=n_heads, k_dim=k_dim, v_dim=v_dim))
    out = jax.block_until_ready(fwd(x, params))

    ref = reference_forward(x, params, n_heads=n_heads, k_dim=k_dim, v_dim=v_dim)
    assert out.shape == (B, n_heads * v_dim, H, in_dim), out.shape
    max_err = float(jnp.max(jnp.abs(out - ref)))
    assert jnp.allclose(out, ref, atol=2e-2, rtol=2e-2), max_err

    print("KERNEL_OK")
</pallas_src>

<mosaic_0001>
module attributes {stable_mosaic.version = 11 : i64} {
  func.func @_qkv_proj_kernel(%arg0: i32, %arg1: memref<2x64xf32, #tpu.memory_space<vmem>>, %arg2: memref<1x64x256xf32, #tpu.memory_space<vmem>>, %arg3: memref<1x64x256xf32, #tpu.memory_space<vmem>>, %arg4: memref<1x64x128xf32, #tpu.memory_space<vmem>>, %arg5: memref<2x256xf32, #tpu.memory_space<vmem>>, %arg6: memref<2x256xf32, #tpu.memory_space<vmem>>, %arg7: memref<2x128xf32, #tpu.memory_space<vmem>>) attributes {dimension_semantics = [#tpu.dimension_semantics<parallel>], iteration_bounds = array<i64: 2>, scalar_prefetch = 0 : i64, scratch_operands = 0 : i64, tpu.core_type = #tpu.core_type<tc>, window_params = [{pipeline_mode = #tpu.pipeline_mode<synchronous>, transform_indices = @transform_0, window_bounds = array<i64: 2, 64>}, {transform_indices = @transform_1, window_bounds = array<i64: 1, 64, 256>}, {transform_indices = @transform_2, window_bounds = array<i64: 1, 64, 256>}, {transform_indices = @transform_3, window_bounds = array<i64: 1, 64, 128>}, {transform_indices = @transform_4, window_bounds = array<i64: 2, 256>}, {transform_indices = @transform_5, window_bounds = array<i64: 2, 256>}, {transform_indices = @transform_6, window_bounds = array<i64: 2, 128>}]} {
    %c0 = arith.constant 0 : index
    %c0_0 = arith.constant 0 : index
    %0 = vector.load %arg1[%c0, %c0_0] : memref<2x64xf32, #tpu.memory_space<vmem>>, vector<2x64xf32>
    %c0_1 = arith.constant 0 : index
    %c0_2 = arith.constant 0 : index
    %c0_3 = arith.constant 0 : index
    %1 = vector.load %arg2[%c0_1, %c0_2, %c0_3] : memref<1x64x256xf32, #tpu.memory_space<vmem>>, vector<1x64x256xf32>
    %2 = vector.shape_cast %1 : vector<1x64x256xf32> to vector<64x256xf32>
    %cst = arith.constant dense<0.000000e+00> : vector<2x256xf32>
    %3 = tpu.matmul %0, %2, %cst {dimension_numbers = #tpu.dot_dimension_numbers<[1], [0], [0], [1], [0, 0, 1, 1], [], []>} : vector<2x64xf32>, vector<64x256xf32>, vector<2x256xf32> -> vector<2x256xf32>
    %c0_4 = arith.constant 0 : index
    %c0_5 = arith.constant 0 : index
    %4 = vector.load %arg5[%c0_4, %c0_5] : memref<2x256xf32, #tpu.memory_space<vmem>>, vector<2x256xf32>
    tpu.vector_store %arg5[%c0_4, %c0_5], %3 {strides = array<i32>} : memref<2x256xf32, #tpu.memory_space<vmem>>, vector<2x256xf32>,
    %c0_6 = arith.constant 0 : index
    %c0_7 = arith.constant 0 : index
    %c0_8 = arith.constant 0 : index
    %5 = vector.load %arg3[%c0_6, %c0_7, %c0_8] : memref<1x64x256xf32, #tpu.memory_space<vmem>>, vector<1x64x256xf32>
    %6 = vector.shape_cast %5 : vector<1x64x256xf32> to vector<64x256xf32>
    %cst_9 = arith.constant dense<0.000000e+00> : vector<2x256xf32>
    %7 = tpu.matmul %0, %6, %cst_9 {dimension_numbers = #tpu.dot_dimension_numbers<[1], [0], [0], [1], [0, 0, 1, 1], [], []>} : vector<2x64xf32>, vector<64x256xf32>, vector<2x256xf32> -> vector<2x256xf32>
    %c0_10 = arith.constant 0 : index
    %c0_11 = arith.constant 0 : index
    %8 = vector.load %arg6[%c0_10, %c0_11] : memref<2x256xf32, #tpu.memory_space<vmem>>, vector<2x256xf32>
    tpu.vector_store %arg6[%c0_10, %c0_11], %7 {strides = array<i32>} : memref<2x256xf32, #tpu.memory_space<vmem>>, vector<2x256xf32>,
    %c0_12 = arith.constant 0 : index
    %c0_13 = arith.constant 0 : index
    %c0_14 = arith.constant 0 : index
    %9 = vector.load %arg4[%c0_12, %c0_13, %c0_14] : memref<1x64x128xf32, #tpu.memory_space<vmem>>, vector<1x64x128xf32>
    %10 = vector.shape_cast %9 : vector<1x64x128xf32> to vector<64x128xf32>
    %cst_15 = arith.constant dense<0.000000e+00> : vector<2x128xf32>
    %11 = tpu.matmul %0, %10, %cst_15 {dimension_numbers = #tpu.dot_dimension_numbers<[1], [0], [0], [1], [0, 0, 1, 1], [], []>} : vector<2x64xf32>, vector<64x128xf32>, vector<2x128xf32> -> vector<2x128xf32>
    %c0_16 = arith.constant 0 : index
    %c0_17 = arith.constant 0 : index
    %12 = vector.load %arg7[%c0_16, %c0_17] : memref<2x128xf32, #tpu.memory_space<vmem>>, vector<2x128xf32>
    tpu.vector_store %arg7[%c0_16, %c0_17], %11 {strides = array<i32>} : memref<2x128xf32, #tpu.memory_space<vmem>>, vector<2x128xf32>,
    return
  }
  func.func @transform_0(%arg0: i32) -> (i32, i32) {
    %c0_i32 = arith.constant 0 : i32
    %c0_i32_0 = arith.constant 0 : i32
    %c0_i32_1 = arith.constant 0 : i32
    return %c0_i32, %c0_i32_0 : i32, i32
  }
  func.func @transform_1(%arg0: i32) -> (i32, i32, i32) {
    %c0_i32 = arith.constant 0 : i32
    %c0_i32_0 = arith.constant 0 : i32
    %c0_i32_1 = arith.constant 0 : i32
    return %arg0, %c0_i32, %c0_i32_0 : i32, i32, i32
  }
  func.func @transform_2(%arg0: i32) -> (i32, i32, i32) {
    %c0_i32 = arith.constant 0 : i32
    %c0_i32_0 = arith.constant 0 : i32
    %c0_i32_1 = arith.constant 0 : i32
    return %arg0, %c0_i32, %c0_i32_0 : i32, i32, i32
  }
  func.func @transform_3(%arg0: i32) -> (i32, i32, i32) {
    %c0_i32 = arith.constant 0 : i32
    %c0_i32_0 = arith.constant 0 : i32
    %c0_i32_1 = arith.constant 0 : i32
    return %arg0, %c0_i32, %c0_i32_0 : i32, i32, i32
  }
  func.func @transform_4(%arg0: i32) -> (i32, i32) {
    %c0_i32 = arith.constant 0 : i32
    %c0_i32_0 = arith.constant 0 : i32
    return %c0_i32, %arg0 : i32, i32
  }
  func.func @transform_5(%arg0: i32) -> (i32, i32) {
    %c0_i32 = arith.constant 0 : i32
    %c0_i32_0 = arith.constant 0 : i32
    return %c0_i32, %arg0 : i32, i32
  }
  func.func @transform_6(%arg0: i32) -> (i32, i32) {
    %c0_i32 = arith.constant 0 : i32
    %c0_i32_0 = arith.constant 0 : i32
    return %c0_i32, %arg0 : i32, i32
  }
}

module attributes {stable_mosaic.version = 11 : i64} {
  func.func @_attn_outproj_kernel(%arg0: i32, %arg1: memref<1x2x32x8xf32, #tpu.memory_space<vmem>>, %arg2: memref<1x2x8x32xf32, #tpu.memory_space<vmem>>, %arg3: memref<1x2x4x32xf32, #tpu.memory_space<vmem>>, %arg4: memref<32x256xf32, #tpu.memory_space<vmem>>, %arg5: memref<1x2x4x256xf32, #tpu.memory_space<vmem>>) attributes {dimension_semantics = [#tpu.dimension_semantics<parallel>], iteration_bounds = array<i64: 2>, scalar_prefetch = 0 : i64, scratch_operands = 0 : i64, tpu.core_type = #tpu.core_type<tc>, window_params = [{transform_indices = @transform_0, window_bounds = array<i64: 1, 2, 32, 8>}, {transform_indices = @transform_1, window_bounds = array<i64: 1, 2, 8, 32>}, {transform_indices = @transform_2, window_bounds = array<i64: 1, 2, 4, 32>}, {pipeline_mode = #tpu.pipeline_mode<synchronous>, transform_indices = @transform_3, window_bounds = array<i64: 32, 256>}, {transform_indices = @transform_4, window_bounds = array<i64: 1, 2, 4, 256>}]} {
    %c0 = arith.constant 0 : index
    %c0_0 = arith.constant 0 : index
    %0 = vector.load %arg4[%c0, %c0_0] : memref<32x256xf32, #tpu.memory_space<vmem>>, vector<32x256xf32>
    %c0_1 = arith.constant 0 : index
    %c0_2 = arith.constant 0 : index
    %c0_3 = arith.constant 0 : index
    %c0_4 = arith.constant 0 : index
    %1 = vector.load %arg1[%c0_1, %c0_2, %c0_3, %c0_4] : memref<1x2x32x8xf32, #tpu.memory_space<vmem>>, vector<1x1x32x8xf32>
    %2 = vector.shape_cast %1 : vector<1x1x32x8xf32> to vector<32x8xf32>
    %c0_5 = arith.constant 0 : index
    %c0_6 = arith.constant 0 : index
    %c0_7 = arith.constant 0 : index
    %c0_8 = arith.constant 0 : index
    %3 = vector.load %arg2[%c0_5, %c0_6, %c0_7, %c0_8] : memref<1x2x8x32xf32, #tpu.memory_space<vmem>>, vector<1x1x8x32xf32>
    %4 = vector.shape_cast %3 : vector<1x1x8x32xf32> to vector<8x32xf32>
    %c0_9 = arith.constant 0 : index
    %c0_10 = arith.constant 0 : index
    %c0_11 = arith.constant 0 : index
    %c0_12 = arith.constant 0 : index
    %5 = vector.load %arg3[%c0_9, %c0_10, %c0_11, %c0_12] : memref<1x2x4x32xf32, #tpu.memory_space<vmem>>, vector<1x1x4x32xf32>
    %6 = vector.shape_cast %5 : vector<1x1x4x32xf32> to vector<4x32xf32>
    %cst = arith.constant dense<0.000000e+00> : vector<32x32xf32>
    %7 = tpu.matmul %2, %4, %cst {dimension_numbers = #tpu.dot_dimension_numbers<[1], [0], [0], [1], [0, 0, 1, 1], [], []>} : vector<32x8xf32>, vector<8x32xf32>, vector<32x32xf32> -> vector<32x32xf32>
    %cst_13 = arith.constant dense<0xFF800000> : vector<32xf32>
    %8 = vector.multi_reduction <maximumf>, %7, %cst_13 [1] : vector<32x32xf32> to vector<32xf32>
    %9 = vector.shape_cast %8 : vector<32xf32> to vector<32x1xf32>
    %10 = vector.broadcast %9 : vector<32x1xf32> to vector<32x32xf32>
    %11 = arith.subf %7, %10 : vector<32x32xf32>
    %12 = math.exp %11 : vector<32x32xf32>
    %cst_14 = arith.constant dense<0.000000e+00> : vector<32xf32>
    %13 = vector.multi_reduction <add>, %12, %cst_14 [1] : vector<32x32xf32> to vector<32xf32>
    %14 = vector.shape_cast %13 : vector<32xf32> to vector<32x1xf32>
    %15 = tpu.reciprocal %14 {approx = true} : vector<32x1xf32> -> vector<32x1xf32>
    %16 = vector.broadcast %15 : vector<32x1xf32> to vector<32x32xf32>
    %17 = arith.mulf %12, %16 : vector<32x32xf32>
    %cst_15 = arith.constant dense<0.000000e+00> : vector<4x32xf32>
    %18 = tpu.matmul %6, %17, %cst_15 {dimension_numbers = #tpu.dot_dimension_numbers<[1], [1], [0], [0], [0, 0, 1, 0], [], []>} : vector<4x32xf32>, vector<32x32xf32>, vector<4x32xf32> -> vector<4x32xf32>
    %cst_16 = arith.constant 0.353553385 : f32
    %19 = vector.broadcast %cst_16 : f32 to vector<4x32xf32>
    %20 = arith.mulf %18, %19 : vector<4x32xf32>
    %cst_17 = arith.constant dense<0.000000e+00> : vector<4x256xf32>
    %21 = tpu.matmul %20, %0, %cst_17 {dimension_numbers = #tpu.dot_dimension_numbers<[1], [0], [0], [1], [0, 0, 1, 1], [], []>} : vector<4x32xf32>, vector<32x256xf32>, vector<4x256xf32> -> vector<4x256xf32>
    %c0_18 = arith.constant 0 : index
    %c0_19 = arith.constant 0 : index
    %c0_20 = arith.constant 0 : index
    %c0_21 = arith.constant 0 : index
    %22 = vector.load %arg5[%c0_18, %c0_19, %c0_20, %c0_21] : memref<1x2x4x256xf32, #tpu.memory_space<vmem>>, vector<1x1x4x256xf32>
    %23 = vector.shape_cast %22 : vector<1x1x4x256xf32> to vector<4x256xf32>
    %24 = vector.shape_cast %21 : vector<4x256xf32> to vector<1x1x4x256xf32>
    tpu.vector_store %arg5[%c0_18, %c0_19, %c0_20, %c0_21], %24 {strides = array<i32>} : memref<1x2x4x256xf32, #tpu.memory_space<vmem>>, vector<1x1x4x256xf32>,
    %c0_22 = arith.constant 0 : index
    %c1 = arith.constant 1 : index
    %c0_23 = arith.constant 0 : index
    %c0_24 = arith.constant 0 : index
    %25 = vector.load %arg1[%c0_22, %c1, %c0_23, %c0_24] : memref<1x2x32x8xf32, #tpu.memory_space<vmem>>, vector<1x1x32x8xf32>
    %26 = vector.shape_cast %25 : vector<1x1x32x8xf32> to vector<32x8xf32>
    %c0_25 = arith.constant 0 : index
    %c1_26 = arith.constant 1 : index
    %c0_27 = arith.constant 0 : index
    %c0_28 = arith.constant 0 : index
    %27 = vector.load %arg2[%c0_25, %c1_26, %c0_27, %c0_28] : memref<1x2x8x32xf32, #tpu.memory_space<vmem>>, vector<1x1x8x32xf32>
    %28 = vector.shape_cast %27 : vector<1x1x8x32xf32> to vector<8x32xf32>
    %c0_29 = arith.constant 0 : index
    %c1_30 = arith.constant 1 : index
    %c0_31 = arith.constant 0 : index
    %c0_32 = arith.constant 0 : index
    %29 = vector.load %arg3[%c0_29, %c1_30, %c0_31, %c0_32] : memref<1x2x4x32xf32, #tpu.memory_space<vmem>>, vector<1x1x4x32xf32>
    %30 = vector.shape_cast %29 : vector<1x1x4x32xf32> to vector<4x32xf32>
    %cst_33 = arith.constant dense<0.000000e+00> : vector<32x32xf32>
    %31 = tpu.matmul %26, %28, %cst_33 {dimension_numbers = #tpu.dot_dimension_numbers<[1], [0], [0], [1], [0, 0, 1, 1], [], []>} : vector<32x8xf32>, vector<8x32xf32>, vector<32x32xf32> -> vector<32x32xf32>
    %cst_34 = arith.constant dense<0xFF800000> : vector<32xf32>
    %32 = vector.multi_reduction <maximumf>, %31, %cst_34 [1] : vector<32x32xf32> to vector<32xf32>
    %33 = vector.shape_cast %32 : vector<32xf32> to vector<32x1xf32>
    %34 = vector.broadcast %33 : vector<32x1xf32> to vector<32x32xf32>
    %35 = arith.subf %31, %34 : vector<32x32xf32>
    %36 = math.exp %35 : vector<32x32xf32>
    %cst_35 = arith.constant dense<0.000000e+00> : vector<32xf32>
    %37 = vector.multi_reduction <add>, %36, %cst_35 [1] : vector<32x32xf32> to vector<32xf32>
    %38 = vector.shape_cast %37 : vector<32xf32> to vector<32x1xf32>
    %39 = tpu.reciprocal %38 {approx = true} : vector<32x1xf32> -> vector<32x1xf32>
    %40 = vector.broadcast %39 : vector<32x1xf32> to vector<32x32xf32>
    %41 = arith.mulf %36, %40 : vector<32x32xf32>
    %cst_36 = arith.constant dense<0.000000e+00> : vector<4x32xf32>
    %42 = tpu.matmul %30, %41, %cst_36 {dimension_numbers = #tpu.dot_dimension_numbers<[1], [1], [0], [0], [0, 0, 1, 0], [], []>} : vector<4x32xf32>, vector<32x32xf32>, vector<4x32xf32> -> vector<4x32xf32>
    %cst_37 = arith.constant 0.353553385 : f32
    %43 = vector.broadcast %cst_37 : f32 to vector<4x32xf32>
    %44 = arith.mulf %42, %43 : vector<4x32xf32>
    %cst_38 = arith.constant dense<0.000000e+00> : vector<4x256xf32>
    %45 = tpu.matmul %44, %0, %cst_38 {dimension_numbers = #tpu.dot_dimension_numbers<[1], [0], [0], [1], [0, 0, 1, 1], [], []>} : vector<4x32xf32>, vector<32x256xf32>, vector<4x256xf32> -> vector<4x256xf32>
    %c0_39 = arith.constant 0 : index
    %c1_40 = arith.constant 1 : index
    %c0_41 = arith.constant 0 : index
    %c0_42 = arith.constant 0 : index
    %46 = vector.load %arg5[%c0_39, %c1_40, %c0_41, %c0_42] : memref<1x2x4x256xf32, #tpu.memory_space<vmem>>, vector<1x1x4x256xf32>
    %47 = vector.shape_cast %46 : vector<1x1x4x256xf32> to vector<4x256xf32>
    %48 = vector.shape_cast %45 : vector<4x256xf32> to vector<1x1x4x256xf32>
    tpu.vector_store %arg5[%c0_39, %c1_40, %c0_41, %c0_42], %48 {strides = array<i32>} : memref<1x2x4x256xf32, #tpu.memory_space<vmem>>, vector<1x1x4x256xf32>,
    return
  }
  func.func @transform_0(%arg0: i32) -> (i32, i32, i32, i32) {
    %c0_i32 = arith.constant 0 : i32
    %c0_i32_0 = arith.constant 0 : i32
    %c0_i32_1 = arith.constant 0 : i32
    %c0_i32_2 = arith.constant 0 : i32
    return %arg0, %c0_i32, %c0_i32_0, %c0_i32_1 : i32, i32, i32, i32
  }
  func.func @transform_1(%arg0: i32) -> (i32, i32, i32, i32) {
    %c0_i32 = arith.constant 0 : i32
    %c0_i32_0 = arith.constant 0 : i32
    %c0_i32_1 = arith.constant 0 : i32
    %c0_i32_2 = arith.constant 0 : i32
    return %arg0, %c0_i32, %c0_i32_0, %c0_i32_1 : i32, i32, i32, i32
  }
  func.func @transform_2(%arg0: i32) -> (i32, i32, i32, i32) {
    %c0_i32 = arith.constant 0 : i32
    %c0_i32_0 = arith.constant 0 : i32
    %c0_i32_1 = arith.constant 0 : i32
    %c0_i32_2 = arith.constant 0 : i32
    return %arg0, %c0_i32, %c0_i32_0, %c0_i32_1 : i32, i32, i32, i32
  }
  func.func @transform_3(%arg0: i32) -> (i32, i32) {
    %c0_i32 = arith.constant 0 : i32
    %c0_i32_0 = arith.constant 0 : i32
    %c0_i32_1 = arith.constant 0 : i32
    return %c0_i32, %c0_i32_0 : i32, i32
  }
  func.func @transform_4(%arg0: i32) -> (i32, i32, i32, i32) {
    %c0_i32 = arith.constant 0 : i32
    %c0_i32_0 = arith.constant 0 : i32
    %c0_i32_1 = arith.constant 0 : i32
    %c0_i32_2 = arith.constant 0 : i32
    return %arg0, %c0_i32, %c0_i32_0, %c0_i32_1 : i32, i32, i32, i32
  }
}

</mosaic_0001>

<llo_original>
// kernel: multi_head_attention.2
$region0: #{multi_head_attention.2}
  #allocation0 [shape = 'u32[]', space=smem, size = 0x4, offset = 0x4, fixed_abs, tag = 'smem constant byte address 0x4 - core index']
  #allocation1 [shape = 'u32[144,128]{1,0:T(1,128)}', space=vmem, size = 0x12000, scoped, tag = 'internal scratch']
  %s0 = inlined_call_operand.vmem [shape: f32[2,64], index: 0, kind: input, shape index: {}]
  %s1 = inlined_call_operand.vmem [shape: f32[2,64,256], index: 1, kind: input, shape index: {}]
  %s2 = inlined_call_operand.vmem [shape: f32[2,64,256], index: 2, kind: input, shape index: {}]
  %s3 = inlined_call_operand.vmem [shape: f32[2,64,128], index: 3, kind: input, shape index: {}]
  %s4 = inlined_call_operand.vmem [shape: f32[2,512], index: 4, kind: output, shape index: {0}]
  %s5 = inlined_call_operand.vmem [shape: f32[2,512], index: 5, kind: output, shape index: {1}]
  %s6 = inlined_call_operand.vmem [shape: f32[2,256], index: 6, kind: output, shape index: {2}]
  %7 = xla_tuple %s4, %s5, %s6
  %s8 = sld [smem:[#allocation0]]
  $region65: #{multi_head_attention.2} parent=0
    _
  %s10 = ssub.s32 1, %s8
  %s11 = scalar_select 0, %s10, %s8
  loop: start=0, step=1, limit=4
  $region2: #{multi_head_attention.2} parent=0 // loop_pre_header
    _
  $region3: #{multi_head_attention.2} parent=0 // loop_header
    %s13 = sphi 0, %s17
    %p14 = scmp.ge.s32.totalorder %s13, 4
    %s21 = sphi 0, %s21
    %s23 = sphi 0, %s21
    %s24 = sphi 0, %s23
    %s38 = sphi 0, %s24
    %s44 = sphi 0, %s46
    %s47 = sphi 0, %s44
    %s48 = sphi 0, %s47
    %s64 = sphi 0, %s48
    %s70 = sphi 0, %s72
    %s73 = sphi 0, %s70
    %s74 = sphi 0, %s73
    %s90 = sphi 0, %s74
    %s96 = sphi 0, %s98
    %s99 = sphi 0, %s96
    %s100 = sphi 0, %s99
    %s116 = sphi 0, %s100
    %s122 = sphi 0, %s124
    %s125 = sphi 0, %s122
    %s126 = sphi 0, %s125
    %s142 = sphi 0, %s126
    %s148 = sphi 0, %s150
    %s151 = sphi 0, %s148
    %s152 = sphi 0, %s151
    %s168 = sphi 0, %s152
    %s174 = sphi 0, %s176
    %s177 = sphi 0, %s174
    %s178 = sphi 0, %s177
    %s194 = sphi 0, %s178
  $region4: #{multi_head_attention.2} parent=0 // loop_header_branch
    %16 = sbr.rel (%p14) target = $region8
  $region5: #{multi_head_attention.2} parent=0 // loop_body
    %s18 = ssub.s32 %s13, 1
    %s19 = ssub.s32 %s13, 2
    %s20 = sadd.s32 %s13, 1
    %s22 = sadd.s32 %s21, 1
    %p25 = scmp.eq.s32.totalorder %s13, 1
    %p26 = scmp.ne.s32.totalorder %s21, %s23
    %p27 = scmp.eq.s32.totalorder %s13, 0
    %p28 = por %p26, %p27
    %p29 = scmp.ne.s32.totalorder %s21, %s23
    %p30 = scmp.eq.s32.totalorder %s18, 1
    %p31 = por %p29, %p30
    %p32 = scmp.ne.s32.totalorder %s23, %s24
    %p33 = scmp.eq.s32.totalorder %s18, 0
    %p34 = por %p32, %p33
    %p35 = scmp.ne.s32.totalorder %s23, %s24
    %p36 = scmp.eq.s32.totalorder %s19, 1
    %p37 = por %p35, %p36
    %p39 = scmp.ne.s32.totalorder %s24, %s38
    %p40 = scmp.eq.s32.totalorder %s19, 0
    %p41 = por %p39, %p40
    %s42 = ssub.s32 %s13, %s20
    %p43 = scmp.eq.s32.totalorder %s42, 0
    %s45 = sadd.s32 %s44, 1
    %s46 = scalar_select %p43, %s44, %s45
    %p49 = pneg %p43
    %p50 = scmp.eq.s32.totalorder %s13, 1
    %p51 = por %p49, %p50
    %p52 = scmp.ne.s32.totalorder %s44, %s47
    %p53 = scmp.eq.s32.totalorder %s13, 0
    %p54 = por %p52, %p53
    %p55 = scmp.ne.s32.totalorder %s44, %s47
    %p56 = scmp.eq.s32.totalorder %s18, 1
    %p57 = por %p55, %p56
    %p58 = scmp.ne.s32.totalorder %s47, %s48
    %p59 = scmp.eq.s32.totalorder %s18, 0
    %p60 = por %p58, %p59
    %p61 = scmp.ne.s32.totalorder %s47, %s48
    %p62 = scmp.eq.s32.totalorder %s19, 1
    %p63 = por %p61, %p62
    %p65 = scmp.ne.s32.totalorder %s48, %s64
    %p66 = scmp.eq.s32.totalorder %s19, 0
    %p67 = por %p65, %p66
    %s68 = ssub.s32 %s13, %s20
    %p69 = scmp.eq.s32.totalorder %s68, 0
    %s71 = sadd.s32 %s70, 1
    %s72 = scalar_select %p69, %s70, %s71
    %p75 = pneg %p69
    %p76 = scmp.eq.s32.totalorder %s13, 1
    %p77 = por %p75, %p76
    %p78 = scmp.ne.s32.totalorder %s70, %s73
    %p79 = scmp.eq.s32.totalorder %s13, 0
    %p80 = por %p78, %p79
    %p81 = scmp.ne.s32.totalorder %s70, %s73
    %p82 = scmp.eq.s32.totalorder %s18, 1
    %p83 = por %p81, %p82
    %p84 = scmp.ne.s32.totalorder %s73, %s74
    %p85 = scmp.eq.s32.totalorder %s18, 0
    %p86 = por %p84, %p85
    %p87 = scmp.ne.s32.totalorder %s73, %s74
    %p88 = scmp.eq.s32.totalorder %s19, 1
    %p89 = por %p87, %p88
    %p91 = scmp.ne.s32.totalorder %s74, %s90
    %p92 = scmp.eq.s32.totalorder %s19, 0
    %p93 = por %p91, %p92
    %s94 = ssub.s32 %s13, %s20
    %p95 = scmp.eq.s32.totalorder %s94, 0
    %s97 = sadd.s32 %s96, 1
    %s98 = scalar_select %p95, %s96, %s97
    %p101 = pneg %p95
    %p102 = scmp.eq.s32.totalorder %s13, 1
    %p103 = por %p101, %p102
    %p104 = scmp.ne.s32.totalorder %s96, %s99
    %p105 = scmp.eq.s32.totalorder %s13, 0
    %p106 = por %p104, %p105
    %p107 = scmp.ne.s32.totalorder %s96, %s99
    %p108 = scmp.eq.s32.totalorder %s18, 1
    %p109 = por %p107, %p108
    %p110 = scmp.ne.s32.totalorder %s99, %s100
    %p111 = scmp.eq.s32.totalorder %s18, 0
    %p112 = por %p110, %p111
    %p113 = scmp.ne.s32.totalorder %s99, %s100
    %p114 = scmp.eq.s32.totalorder %s19, 1
    %p115 = por %p113, %p114
    %p117 = scmp.ne.s32.totalorder %s100, %s116
    %p118 = scmp.eq.s32.totalorder %s19, 0
    %p119 = por %p117, %p118
    %s120 = ssub.s32 %s13, %s20
    %p121 = scmp.eq.s32.totalorder %s120, 0
    %s123 = sadd.s32 %s122, 1
    %s124 = scalar_select %p121, %s122, %s123
    %p127 = pneg %p121
    %p128 = scmp.eq.s32.totalorder %s13, 1
    %p129 = por %p127, %p128
    %p130 = scmp.ne.s32.totalorder %s122, %s125
    %p131 = scmp.eq.s32.totalorder %s13, 0
    %p132 = por %p130, %p131
    %p133 = scmp.ne.s32.totalorder %s122, %s125
    %p134 = scmp.eq.s32.totalorder %s18, 1
    %p135 = por %p133, %p134
    %p136 = scmp.ne.s32.totalorder %s125, %s126
    %p137 = scmp.eq.s32.totalorder %s18, 0
    %p138 = por %p136, %p137
    %p139 = scmp.ne.s32.totalorder %s125, %s126
    %p140 = scmp.eq.s32.totalorder %s19, 1
    %p141 = por %p139, %p140
    %p143 = scmp.ne.s32.totalorder %s126, %s142
    %p144 = scmp.eq.s32.totalorder %s19, 0
    %p145 = por %p143, %p144
    %s146 = ssub.s32 %s13, %s20
    %p147 = scmp.eq.s32.totalorder %s146, 0
    %s149 = sadd.s32 %s148, 1
    %s150 = scalar_select %p147, %s148, %s149
    %p153 = pneg %p147
    %p154 = scmp.eq.s32.totalorder %s13, 1
    %p155 = por %p153, %p154
    %p156 = scmp.ne.s32.totalorder %s148, %s151
    %p157 = scmp.eq.s32.totalorder %s13, 0
    %p158 = por %p156, %p157
    %p159 = scmp.ne.s32.totalorder %s148, %s151
    %p160 = scmp.eq.s32.totalorder %s18, 1
    %p161 = por %p159, %p160
    %p162 = scmp.ne.s32.totalorder %s151, %s152
    %p163 = scmp.eq.s32.totalorder %s18, 0
    %p164 = por %p162, %p163
    %p165 = scmp.ne.s32.totalorder %s151, %s152
    %p166 = scmp.eq.s32.totalorder %s19, 1
    %p167 = por %p165, %p166
    %p169 = scmp.ne.s32.totalorder %s152, %s168
    %p170 = scmp.eq.s32.totalorder %s19, 0
    %p171 = por %p169, %p170
    %s172 = ssub.s32 %s13, %s20
    %p173 = scmp.eq.s32.totalorder %s172, 0
    %s175 = sadd.s32 %s174, 1
    %s176 = scalar_select %p173, %s174, %s175
    %p179 = pneg %p173
    %p180 = scmp.eq.s32.totalorder %s13, 1
    %p181 = por %p179, %p180
    %p182 = scmp.ne.s32.totalorder %s174, %s177
    %p183 = scmp.eq.s32.totalorder %s13, 0
    %p184 = por %p182, %p183
    %p185 = scmp.ne.s32.totalorder %s174, %s177
    %p186 = scmp.eq.s32.totalorder %s18, 1
    %p187 = por %p185, %p186
    %p188 = scmp.ne.s32.totalorder %s177, %s178
    %p189 = scmp.eq.s32.totalorder %s18, 0
    %p190 = por %p188, %p189
    %p191 = scmp.ne.s32.totalorder %s177, %s178
    %p192 = scmp.eq.s32.totalorder %s19, 1
    %p193 = por %p191, %p192
    %p195 = scmp.ne.s32.totalorder %s178, %s194
    %p196 = scmp.eq.s32.totalorder %s19, 0
    %p197 = por %p195, %p196
    %p198 = scmp.le.s32.totalorder 1, %s13
    %p199 = scmp.lt.s32.totalorder %s13, 3
    %p200 = pnand %p198, %p199
    %p201 = pneg %p200
    // Predicated region
    $region9: #{multi_head_attention.2} parent=5 // pred_check
      _
    $region10: #{multi_head_attention.2} parent=5 // pred_check_branch
      %203 = sbr.rel (%p200) target = $region12
    $region11: #{multi_head_attention.2} parent=5 // pred_region
      %s204 = ssub.s32 %s13, 1
      // Predicated region
      $region13: #{multi_head_attention.2} parent=11 // pred_check
        %p205 = pneg %p34
      $region14: #{multi_head_attention.2} parent=11 // pred_check_branch
        %207 = sbr.rel (%p205) target = $region16
      $region15: #{multi_head_attention.2} parent=11 // pred_region
        _
      $region16: #{multi_head_attention.2} parent=11 // pred_fallthru
        _
    $region12: #{multi_head_attention.2} parent=5 // pred_fallthru
      _
    %p208 = scmp.lt.s32.totalorder %s13, 2
    // Predicated region
    $region17: #{multi_head_attention.2} parent=5 // pred_check
      %p209 = pneg %p208
    $region18: #{multi_head_attention.2} parent=5 // pred_check_branch
      %211 = sbr.rel (%p209) target = $region20
    $region19: #{multi_head_attention.2} parent=5 // pred_region
      // Predicated region
      $region21: #{multi_head_attention.2} parent=19 // pred_check
        %p212 = pneg %p54
      $region22: #{multi_head_attention.2} parent=19 // pred_check_branch
        %214 = sbr.rel (%p212) target = $region24
      $region23: #{multi_head_attention.2} parent=19 // pred_region
        %p215 = scmp.lt.s32.totalorder %s13, 1
        %s216 = scalar_select %p215, %s13, 1
        %s217 = smul.addr %s216, 16
        %s218 = smul.addr %s217, 8
        %s219 = scalar_lea.vmem %s1, %s218
      $region24: #{multi_head_attention.2} parent=19 // pred_fallthru
        _
      // Predicated region
      $region25: #{multi_head_attention.2} parent=19 // pred_check
        %p220 = pneg %p80
      $region26: #{multi_head_attention.2} parent=19 // pred_check_branch
        %222 = sbr.rel (%p220) target = $region28
      $region27: #{multi_head_attention.2} parent=19 // pred_region
        %p223 = scmp.lt.s32.totalorder %s13, 1
        %s224 = scalar_select %p223, %s13, 1
        %s225 = smul.addr %s224, 16
        %s226 = smul.addr %s225, 8
        %s227 = scalar_lea.vmem %s2, %s226
      $region28: #{multi_head_attention.2} parent=19 // pred_fallthru
        _
      // Predicated region
      $region29: #{multi_head_attention.2} parent=19 // pred_check
        %p228 = pneg %p106
      $region30: #{multi_head_attention.2} parent=19 // pred_check_branch
        %230 = sbr.rel (%p228) target = $region32
      $region31: #{multi_head_attention.2} parent=19 // pred_region
        %p231 = scmp.lt.s32.totalorder %s13, 1
        %s232 = scalar_select %p231, %s13, 1
        %s233 = smul.addr %s232, 8
        %s234 = smul.addr %s233, 8
        %s235 = scalar_lea.vmem %s3, %s234
      $region32: #{multi_head_attention.2} parent=19 // pred_fallthru
        _
    $region20: #{multi_head_attention.2} parent=5 // pred_fallthru
      _
    %p236 = scmp.le.s32.totalorder 1, %s13
    %p237 = scmp.lt.s32.totalorder %s13, 3
    %p238 = pnand %p236, %p237
    %p239 = pneg %p238
    // Predicated region
    $region33: #{multi_head_attention.2} parent=5 // pred_check
      _
    $region34: #{multi_head_attention.2} parent=5 // pred_check_branch
      %241 = sbr.rel (%p238) target = $region36
    $region35: #{multi_head_attention.2} parent=5 // pred_region
      %s242 = ssub.s32 %s13, 1
      %p243 = pneg %p34
      %p244 = pneg %p31
      %p245 = scmp.lt.s32.totalorder %s18, 1
      %s246 = scalar_select %p245, %s18, 1
      %s247 = smul.addr %s246, 16
      %s248 = smul.addr %s247, 8
      %s249 = scalar_lea.vmem %s1, %s248
      %p250 = pneg %p60
      %p251 = pneg %p57
      %p252 = scmp.lt.s32.totalorder %s18, 1
      %s253 = scalar_select %p252, %s18, 1
      %s254 = smul.addr %s253, 16
      %s255 = smul.addr %s254, 8
      %s256 = scalar_lea.vmem %s2, %s255
      %p257 = pneg %p86
      %p258 = pneg %p83
      %p259 = scmp.lt.s32.totalorder %s18, 1
      %s260 = scalar_select %p259, %s18, 1
      %s261 = smul.addr %s260, 8
      %s262 = smul.addr %s261, 8
      %s263 = scalar_lea.vmem %s3, %s262
      %p264 = pneg %p112
      %p265 = pneg %p109
      %p266 = pneg %p138
      %p267 = pneg %p135
      %s268 = smul.u32 2, %s18
      %p269 = scmp.lt.s32.totalorder %s268, 3
      %s270 = scalar_select %p269, %s268, 3
      %s271 = smul.addr %s270, 2
      %s272 = scalar_lea.vmem %s4, %s271
      %p273 = pneg %p164
      %p274 = pneg %p161
      %s275 = smul.u32 2, %s18
      %p276 = scmp.lt.s32.totalorder %s275, 3
      %s277 = scalar_select %p276, %s275, 3
      %s278 = smul.addr %s277, 2
      %s279 = scalar_lea.vmem %s5, %s278
      %p280 = pneg %p190
      %p281 = pneg %p187
      %p282 = scmp.lt.s32.totalorder %s18, 1
      %s283 = scalar_select %p282, %s18, 1
      %s284 = smul.addr %s283, 2
      %s285 = scalar_lea.vmem %s6, %s284
      %p286 = scmp.lt.s32.totalorder %s18, 1
      %s287 = scalar_select %p286, %s18, 1
      %s288 = smul.addr %s287, 16
      %s289 = smul.addr %s288, 8
      %s290 = scalar_lea.vmem %s1, %s289
      %p291 = scmp.lt.s32.totalorder %s18, 1
      %s292 = scalar_select %p291, %s18, 1
      %s293 = smul.addr %s292, 16
      %s294 = smul.addr %s293, 8
      %s295 = scalar_lea.vmem %s2, %s294
      %p296 = scmp.lt.s32.totalorder %s18, 1
      %s297 = scalar_select %p296, %s18, 1
      %s298 = smul.addr %s297, 8
      %s299 = smul.addr %s298, 8
      %s300 = scalar_lea.vmem %s3, %s299
      %s301 = smul.u32 2, %s18
      %p302 = scmp.lt.s32.totalorder %s301, 3
      %s303 = scalar_select %p302, %s301, 3
      %s304 = smul.addr %s303, 2
      %s305 = scalar_lea.vmem %s4, %s304
      %s306 = smul.u32 2, %s18
      %s307 = smul.u32 2, %s18
      %p308 = scmp.lt.s32.totalorder %s307, 3
      %s309 = scalar_select %p308, %s307, 3
      %s310 = smul.addr %s309, 2
      %s311 = scalar_lea.vmem %s5, %s310
      %s312 = smul.u32 2, %s18
      %p313 = scmp.lt.s32.totalorder %s18, 1
      %s314 = scalar_select %p313, %s18, 1
      %s315 = smul.addr %s314, 2
      %s316 = scalar_lea.vmem %s6, %s315
      %v317 = vld [vmem:[%s0] sm:$0x3]
      %v318 = vld [vmem:[%s290] sm:$0xff]
      %v319 = vld [vmem:[%s290 + $0x8] sm:$0xff]
      %v320 = vld [vmem:[%s290 + $0x10] sm:$0xff]
      %v321 = vld [vmem:[%s290 + $0x18] sm:$0xff]
      %v322 = vld [vmem:[%s290 + $0x20] sm:$0xff]
      %v323 = vld [vmem:[%s290 + $0x28] sm:$0xff]
      %v324 = vld [vmem:[%s290 + $0x30] sm:$0xff]
      %v325 = vld [vmem:[%s290 + $0x38] sm:$0xff]
      %v326 = vld [vmem:[%s290 + $0x40] sm:$0xff]
      %v327 = vld [vmem:[%s290 + $0x48] sm:$0xff]
      %v328 = vld [vmem:[%s290 + $0x50] sm:$0xff]
      %v329 = vld [vmem:[%s290 + $0x58] sm:$0xff]
      %v330 = vld [vmem:[%s290 + $0x60] sm:$0xff]
      %v331 = vld [vmem:[%s290 + $0x68] sm:$0xff]
      %v332 = vld [vmem:[%s290 + $0x70] sm:$0xff]
      %v333 = vld [vmem:[%s290 + $0x78] sm:$0xff]
      %vm334 = vcmask 523264
      %v336 = vsel %vm334, %v317, 0
      %338 = vmatprep.subr.mxu0 %v319
      %339 = vmatpush1.msra.mxu0 %v318
      %340 = vmatprep.subr.mxu0 %v321
      %341 = vmatpush1.msra.mxu0 %v320
      %342 = vmatprep.subr.mxu0 %v323
      %343 = vmatpush1.msra.mxu0 %v322
      %344 = vmatprep.subr.mxu0 %v325
      %345 = vmatpush1.msra.mxu0 %v324
      %346 = vmatprep.subr.mxu0 %v327
      %347 = vmatpush1.msra.mxu0 %v326
      %348 = vmatprep.subr.mxu0 %v329
      %349 = vmatpush1.msra.mxu0 %v328
      %350 = vmatprep.subr.mxu0 %v331
      %351 = vmatpush1.msra.mxu0 %v330
      %352 = vmatprep.subr.mxu0 %v333
      %353 = vmatpush1.msra.mxu0 %v332
      %354 = vmatprep.subr.mxu0 0.0
      %355 = vmatpush1.msra.mxu0 0.0
      %356 = vmatprep.subr.mxu0 0.0
      %357 = vmatpush1.msra.mxu0 0.0
      %358 = vmatprep.subr.mxu0 0.0
      %359 = vmatpush1.msra.mxu0 0.0
      %360 = vmatprep.subr.mxu0 0.0
      %361 = vmatpush1.msra.mxu0 0.0
      %362 = vmatprep.subr.mxu0 0.0
      %363 = vmatpush1.msra.mxu0 0.0
      %364 = vmatprep.subr.mxu0 0.0
      %365 = vmatpush1.msra.mxu0 0.0
      %366 = vmatprep.subr.mxu0 0.0
      %367 = vmatpush1.msra.mxu0 0.0
      %368 = vmatprep.subr.mxu0 0.0
      %369 = vmatpush1.msra.mxu0 0.0
      %370 = vmatprep.subr.mxu0 0.0
      %371 = vmatpush1.msra.mxu0 0.0
      %372 = vmatprep.subr.mxu0 0.0
      %373 = vmatpush1.msra.mxu0 0.0
      %374 = vmatprep.subr.mxu0 0.0
      %375 = vmatpush1.msra.mxu0 0.0
      %376 = vmatprep.subr.mxu0 0.0
      %377 = vmatpush1.msra.mxu0 0.0
      %378 = vmatprep.subr.mxu0 0.0
      %379 = vmatpush1.msra.mxu0 0.0
      %380 = vmatprep.subr.mxu0 0.0
      %381 = vmatpush1.msra.mxu0 0.0
      %382 = vmatprep.subr.mxu0 0.0
      %383 = vmatpush1.msra.mxu0 0.0
      %384 = vmatprep.subr.mxu0 0.0
      %385 = vmatpush1.msra.mxu0 0.0
      %386 = vmatprep.subr.mxu0 0.0
      %387 = vmatpush1.msra.mxu0 0.0
      %388 = vmatprep.subr.mxu0 0.0
      %389 = vmatpush1.msra.mxu0 0.0
      %390 = vmatprep.subr.mxu0 0.0
      %391 = vmatpush1.msra.mxu0 0.0
      %392 = vmatprep.subr.mxu0 0.0
      %393 = vmatpush1.msra.mxu0 0.0
      %394 = vmatprep.subr.mxu0 0.0
      %395 = vmatpush1.msra.mxu0 0.0
      %396 = vmatprep.subr.mxu0 0.0
      %397 = vmatpush1.msra.mxu0 0.0
      %398 = vmatprep.subr.mxu0 0.0
      %399 = vmatpush1.msra.mxu0 0.0
      %400 = vmatprep.subr.mxu0 0.0
      %401 = vmatpush1.msra.mxu0 0.0
      %402 = vmatprep.mubr.f32.mxu0 0.0
      %403 = vmatmul.mubr.f32.gmra.mrb[0].mxu0 %v336
      %v404 = vpop.f32.mrb[0].mxu0
      %v405 = vadd.f32 0.0, %v404
      %v406 = vpop.f32.mrb[0].mxu0
      %v407 = vadd.f32 0.0, %v406
      %408 = vdwg.mxu0
      %v411 = vcombine.low %v405, %v407
      %v413 = vunpack.c.l.s4 1983009808
      %v414 = vunpack.c.0.s8 %v413
      %v415 = vlaneseq
      %v416 = vshrl.u32 %v415, 7
      %v417 = vsub.s32 %v414, %v416
      %v418 = vrot.slane %v411, %v417
      %420 = vst [vmem:[%s305] sm:$0xf] %v418
      %v421 = vld [vmem:[%s295] sm:$0xff]
      %v422 = vld [vmem:[%s295 + $0x8] sm:$0xff]
      %v423 = vld [vmem:[%s295 + $0x10] sm:$0xff]
      %v424 = vld [vmem:[%s295 + $0x18] sm:$0xff]
      %v425 = vld [vmem:[%s295 + $0x20] sm:$0xff]
      %v426 = vld [vmem:[%s295 + $0x28] sm:$0xff]
      %v427 = vld [vmem:[%s295 + $0x30] sm:$0xff]
      %v428 = vld [vmem:[%s295 + $0x38] sm:$0xff]
      %v429 = vld [vmem:[%s295 + $0x40] sm:$0xff]
      %v430 = vld [vmem:[%s295 + $0x48] sm:$0xff]
      %v431 = vld [vmem:[%s295 + $0x50] sm:$0xff]
      %v432 = vld [vmem:[%s295 + $0x58] sm:$0xff]
      %v433 = vld [vmem:[%s295 + $0x60] sm:$0xff]
      %v434 = vld [vmem:[%s295 + $0x68] sm:$0xff]
      %v435 = vld [vmem:[%s295 + $0x70] sm:$0xff]
      %v436 = vld [vmem:[%s295 + $0x78] sm:$0xff]
      %437 = vmatprep.subr.mxu0 %v422
      %438 = vmatpush1.msra.mxu0 %v421
      %439 = vmatprep.subr.mxu0 %v424
      %440 = vmatpush1.msra.mxu0 %v423
      %441 = vmatprep.subr.mxu0 %v426
      %442 = vmatpush1.msra.mxu0 %v425
      %443 = vmatprep.subr.mxu0 %v428
      %444 = vmatpush1.msra.mxu0 %v427
      %445 = vmatprep.subr.mxu0 %v430
      %446 = vmatpush1.msra.mxu0 %v429
      %447 = vmatprep.subr.mxu0 %v432
      %448 = vmatpush1.msra.mxu0 %v431
      %449 = vmatprep.subr.mxu0 %v434
      %450 = vmatpush1.msra.mxu0 %v433
      %451 = vmatprep.subr.mxu0 %v436
      %452 = vmatpush1.msra.mxu0 %v435
      %453 = vmatprep.subr.mxu0 0.0
      %454 = vmatpush1.msra.mxu0 0.0
      %455 = vmatprep.subr.mxu0 0.0
      %456 = vmatpush1.msra.mxu0 0.0
      %457 = vmatprep.subr.mxu0 0.0
      %458 = vmatpush1.msra.mxu0 0.0
      %459 = vmatprep.subr.mxu0 0.0
      %460 = vmatpush1.msra.mxu0 0.0
      %461 = vmatprep.subr.mxu0 0.0
      %462 = vmatpush1.msra.mxu0 0.0
      %463 = vmatprep.subr.mxu0 0.0
      %464 = vmatpush1.msra.mxu0 0.0
      %465 = vmatprep.subr.mxu0 0.0
      %466 = vmatpush1.msra.mxu0 0.0
      %467 = vmatprep.subr.mxu0 0.0
      %468 = vmatpush1.msra.mxu0 0.0
      %469 = vmatprep.subr.mxu0 0.0
      %470 = vmatpush1.msra.mxu0 0.0
      %471 = vmatprep.subr.mxu0 0.0
      %472 = vmatpush1.msra.mxu0 0.0
      %473 = vmatprep.subr.mxu0 0.0
      %474 = vmatpush1.msra.mxu0 0.0
      %475 = vmatprep.subr.mxu0 0.0
      %476 = vmatpush1.msra.mxu0 0.0
      %477 = vmatprep.subr.mxu0 0.0
      %478 = vmatpush1.msra.mxu0 0.0
      %479 = vmatprep.subr.mxu0 0.0
      %480 = vmatpush1.msra.mxu0 0.0
      %481 = vmatprep.subr.mxu0 0.0
      %482 = vmatpush1.msra.mxu0 0.0
      %483 = vmatprep.subr.mxu0 0.0
      %484 = vmatpush1.msra.mxu0 0.0
      %485 = vmatprep.subr.mxu0 0.0
      %486 = vmatpush1.msra.mxu0 0.0
      %487 = vmatprep.subr.mxu0 0.0
      %488 = vmatpush1.msra.mxu0 0.0
      %489 = vmatprep.subr.mxu0 0.0
      %490 = vmatpush1.msra.mxu0 0.0
      %491 = vmatprep.subr.mxu0 0.0
      %492 = vmatpush1.msra.mxu0 0.0
      %493 = vmatprep.subr.mxu0 0.0
      %494 = vmatpush1.msra.mxu0 0.0
      %495 = vmatprep.subr.mxu0 0.0
      %496 = vmatpush1.msra.mxu0 0.0
      %497 = vmatprep.subr.mxu0 0.0
      %498 = vmatpush1.msra.mxu0 0.0
      %499 = vmatprep.subr.mxu0 0.0
      %500 = vmatpush1.msra.mxu0 0.0
      %501 = vmatprep.mubr.f32.mxu0 0.0
      %502 = vmatmul.mubr.f32.gmra.mrb[0].mxu0 %v336
      %v503 = vpop.f32.mrb[0].mxu0
      %v504 = vadd.f32 0.0, %v503
      %v505 = vpop.f32.mrb[0].mxu0
      %v506 = vadd.f32 0.0, %v505
      %507 = vdwg.mxu0
      %v510 = vcombine.low %v504, %v506
      %v512 = vunpack.c.l.s4 1983009808
      %v513 = vunpack.c.0.s8 %v512
      %v514 = vlaneseq
      %v515 = vshrl.u32 %v514, 7
      %v516 = vsub.s32 %v513, %v515
      %v517 = vrot.slane %v510, %v516
      %519 = vst [vmem:[%s311] sm:$0xf] %v517
      %v520 = vld [vmem:[%s300] sm:$0xff]
      %v521 = vld [vmem:[%s300 + $0x8] sm:$0xff]
      %v522 = vld [vmem:[%s300 + $0x10] sm:$0xff]
      %v523 = vld [vmem:[%s300 + $0x18] sm:$0xff]
      %v524 = vld [vmem:[%s300 + $0x20] sm:$0xff]
      %v525 = vld [vmem:[%s300 + $0x28] sm:$0xff]
      %v526 = vld [vmem:[%s300 + $0x30] sm:$0xff]
      %v527 = vld [vmem:[%s300 + $0x38] sm:$0xff]
      %528 = vmatprep.subr.mxu0 0.0
      %529 = vmatpush1.msra.mxu0 %v520
      %530 = vmatprep.subr.mxu0 0.0
      %531 = vmatpush1.msra.mxu0 %v521
      %532 = vmatprep.subr.mxu0 0.0
      %533 = vmatpush1.msra.mxu0 %v522
      %534 = vmatprep.subr.mxu0 0.0
      %535 = vmatpush1.msra.mxu0 %v523
      %536 = vmatprep.subr.mxu0 0.0
      %537 = vmatpush1.msra.mxu0 %v524
      %538 = vmatprep.subr.mxu0 0.0
      %539 = vmatpush1.msra.mxu0 %v525
      %540 = vmatprep.subr.mxu0 0.0
      %541 = vmatpush1.msra.mxu0 %v526
      %542 = vmatprep.subr.mxu0 0.0
      %543 = vmatpush1.msra.mxu0 %v527
      %544 = vmatprep.subr.mxu0 0.0
      %545 = vmatpush1.msra.mxu0 0.0
      %546 = vmatprep.subr.mxu0 0.0
      %547 = vmatpush1.msra.mxu0 0.0
      %548 = vmatprep.subr.mxu0 0.0
      %549 = vmatpush1.msra.mxu0 0.0
      %550 = vmatprep.subr.mxu0 0.0
      %551 = vmatpush1.msra.mxu0 0.0
      %552 = vmatprep.subr.mxu0 0.0
      %553 = vmatpush1.msra.mxu0 0.0
      %554 = vmatprep.subr.mxu0 0.0
      %555 = vmatpush1.msra.mxu0 0.0
      %556 = vmatprep.subr.mxu0 0.0
      %557 = vmatpush1.msra.mxu0 0.0
      %558 = vmatprep.subr.mxu0 0.0
      %559 = vmatpush1.msra.mxu0 0.0
      %560 = vmatprep.subr.mxu0 0.0
      %561 = vmatpush1.msra.mxu0 0.0
      %562 = vmatprep.subr.mxu0 0.0
      %563 = vmatpush1.msra.mxu0 0.0
      %564 = vmatprep.subr.mxu0 0.0
      %565 = vmatpush1.msra.mxu0 0.0
      %566 = vmatprep.subr.mxu0 0.0
      %567 = vmatpush1.msra.mxu0 0.0
      %568 = vmatprep.subr.mxu0 0.0
      %569 = vmatpush1.msra.mxu0 0.0
      %570 = vmatprep.subr.mxu0 0.0
      %571 = vmatpush1.msra.mxu0 0.0
      %572 = vmatprep.subr.mxu0 0.0
      %573 = vmatpush1.msra.mxu0 0.0
      %574 = vmatprep.subr.mxu0 0.0
      %575 = vmatpush1.msra.mxu0 0.0
      %576 = vmatprep.subr.mxu0 0.0
      %577 = vmatpush1.msra.mxu0 0.0
      %578 = vmatprep.subr.mxu0 0.0
      %579 = vmatpush1.msra.mxu0 0.0
      %580 = vmatprep.subr.mxu0 0.0
      %581 = vmatpush1.msra.mxu0 0.0
      %582 = vmatprep.subr.mxu0 0.0
      %583 = vmatpush1.msra.mxu0 0.0
      %584 = vmatprep.subr.mxu0 0.0
      %585 = vmatpush1.msra.mxu0 0.0
      %586 = vmatprep.subr.mxu0 0.0
      %587 = vmatpush1.msra.mxu0 0.0
      %588 = vmatprep.subr.mxu0 0.0
      %589 = vmatpush1.msra.mxu0 0.0
      %590 = vmatprep.subr.mxu0 0.0
      %591 = vmatpush1.msra.mxu0 0.0
      %592 = vmatprep.mubr.f32.mxu0 0.0
      %593 = vmatmul.mubr.f32.gmra.mrb[0].mxu0 %v336
      %v594 = vpop.f32.mrb[0].mxu0
      %v595 = vadd.f32 0.0, %v594
      %v596 = vpop.f32.mrb[0].mxu0
      %597 = vdwg.mxu0
      %598 = vst [vmem:[%s316] sm:$0x3] %v595
      %s599 = smul.u32 2, %s18
      %p600 = scmp.lt.s32.totalorder %s599, 3
      %s601 = scalar_select %p600, %s599, 3
      %s602 = smul.addr %s601, 2
      %s603 = scalar_lea.vmem %s4, %s602
      %s604 = smul.u32 2, %s18
      %p605 = scmp.lt.s32.totalorder %s604, 3
      %s606 = scalar_select %p605, %s604, 3
      %s607 = smul.addr %s606, 2
      %s608 = scalar_lea.vmem %s5, %s607
      %p609 = scmp.lt.s32.totalorder %s18, 1
      %s610 = scalar_select %p609, %s18, 1
      %s611 = smul.addr %s610, 2
      %s612 = scalar_lea.vmem %s6, %s611
      // Predicated region
      $region37: #{multi_head_attention.2} parent=35 // pred_check
        %p613 = pneg %p135
      $region38: #{multi_head_attention.2} parent=35 // pred_check_branch
        %615 = sbr.rel (%p613) target = $region40
      $region39: #{multi_head_attention.2} parent=35 // pred_region
        %s616 = smul.u32 2, %s18
      $region40: #{multi_head_attention.2} parent=35 // pred_fallthru
        _
      // Predicated region
      $region41: #{multi_head_attention.2} parent=35 // pred_check
        %p617 = pneg %p161
      $region42: #{multi_head_attention.2} parent=35 // pred_check_branch
        %619 = sbr.rel (%p617) target = $region44
      $region43: #{multi_head_attention.2} parent=35 // pred_region
        %s620 = smul.u32 2, %s18
      $region44: #{multi_head_attention.2} parent=35 // pred_fallthru
        _
      // Predicated region
      $region45: #{multi_head_attention.2} parent=35 // pred_check
        %p621 = pneg %p187
      $region46: #{multi_head_attention.2} parent=35 // pred_check_branch
        %623 = sbr.rel (%p621) target = $region48
      $region47: #{multi_head_attention.2} parent=35 // pred_region
        _
      $region48: #{multi_head_attention.2} parent=35 // pred_fallthru
        _
    $region36: #{multi_head_attention.2} parent=5 // pred_fallthru
      _
    %p624 = scmp.le.s32.totalorder 2, %s13
    // Predicated region
    $region49: #{multi_head_attention.2} parent=5 // pred_check
      %p625 = pneg %p624
    $region50: #{multi_head_attention.2} parent=5 // pred_check_branch
      %627 = sbr.rel (%p625) target = $region52
    $region51: #{multi_head_attention.2} parent=5 // pred_region
      %s628 = ssub.s32 %s13, 2
      // Predicated region
      $region53: #{multi_head_attention.2} parent=51 // pred_check
        %p629 = pneg %p141
      $region54: #{multi_head_attention.2} parent=51 // pred_check_branch
        %631 = sbr.rel (%p629) target = $region56
      $region55: #{multi_head_attention.2} parent=51 // pred_region
        %s632 = smul.u32 2, %s19
        %p633 = scmp.lt.s32.totalorder %s632, 3
        %s634 = scalar_select %p633, %s632, 3
        %s635 = smul.addr %s634, 2
        %s636 = scalar_lea.vmem %s4, %s635
      $region56: #{multi_head_attention.2} parent=51 // pred_fallthru
        _
      // Predicated region
      $region57: #{multi_head_attention.2} parent=51 // pred_check
        %p637 = pneg %p167
      $region58: #{multi_head_attention.2} parent=51 // pred_check_branch
        %639 = sbr.rel (%p637) target = $region60
      $region59: #{multi_head_attention.2} parent=51 // pred_region
        %s640 = smul.u32 2, %s19
        %p641 = scmp.lt.s32.totalorder %s640, 3
        %s642 = scalar_select %p641, %s640, 3
        %s643 = smul.addr %s642, 2
        %s644 = scalar_lea.vmem %s5, %s643
      $region60: #{multi_head_attention.2} parent=51 // pred_fallthru
        _
      // Predicated region
      $region61: #{multi_head_attention.2} parent=51 // pred_check
        %p645 = pneg %p193
      $region62: #{multi_head_attention.2} parent=51 // pred_check_branch
        %647 = sbr.rel (%p645) target = $region64
      $region63: #{multi_head_attention.2} parent=51 // pred_region
        %p648 = scmp.lt.s32.totalorder %s19, 1
        %s649 = scalar_select %p648, %s19, 1
        %s650 = smul.addr %s649, 2
        %s651 = scalar_lea.vmem %s6, %s650
      $region64: #{multi_head_attention.2} parent=51 // pred_fallthru
        _
    $region52: #{multi_head_attention.2} parent=5 // pred_fallthru
      _
  $region6: #{multi_head_attention.2} parent=0 // loop_footer
    %s17 = sadd.s32 1, %s13
  $region7: #{multi_head_attention.2} parent=0 // loop_footer_branch
    %12 = sbr.rel target = $region3
  $region8: #{multi_head_attention.2} parent=0 // loop_exit
    _

// kernel: multi_head_attention.3
$region0: #{multi_head_attention.3}
  #allocation0 [shape = 'u32[]', space=smem, size = 0x4, offset = 0x4, fixed_abs, tag = 'smem constant byte address 0x4 - core index']
  #allocation1 [shape = 'u32[144,128]{1,0:T(1,128)}', space=vmem, size = 0x12000, scoped, tag = 'internal scratch']
  %s0 = inlined_call_operand.vmem [shape: f32[2,2,32,8], index: 0, kind: input, shape index: {}]
  %s1 = inlined_call_operand.vmem [shape: f32[2,2,8,32], index: 1, kind: input, shape index: {}]
  %s2 = inlined_call_operand.vmem [shape: f32[2,2,4,32], index: 2, kind: input, shape index: {}]
  %s3 = inlined_call_operand.vmem [shape: f32[32,256], index: 3, kind: input, shape index: {}]
  %s4 = inlined_call_operand.vmem [shape: f32[2,2,4,256], index: 4, kind: output, shape index: {}]
  %s5 = sld [smem:[#allocation0]]
  $region49: #{multi_head_attention.3} parent=0
    _
  %s7 = ssub.s32 1, %s5
  %s8 = scalar_select 0, %s7, %s5
  loop: start=0, step=1, limit=4
  $region2: #{multi_head_attention.3} parent=0 // loop_pre_header
    _
  $region3: #{multi_head_attention.3} parent=0 // loop_header
    %s10 = sphi 0, %s14
    %p11 = scmp.ge.s32.totalorder %s10, 4
    %s20 = sphi 0, %s22
    %s23 = sphi 0, %s20
    %s24 = sphi 0, %s23
    %s40 = sphi 0, %s24
    %s46 = sphi 0, %s48
    %s49 = sphi 0, %s46
    %s50 = sphi 0, %s49
    %s66 = sphi 0, %s50
    %s72 = sphi 0, %s74
    %s75 = sphi 0, %s72
    %s76 = sphi 0, %s75
    %s92 = sphi 0, %s76
    %s96 = sphi 0, %s96
    %s98 = sphi 0, %s96
    %s99 = sphi 0, %s98
    %s113 = sphi 0, %s99
    %s119 = sphi 0, %s121
    %s122 = sphi 0, %s119
    %s123 = sphi 0, %s122
    %s139 = sphi 0, %s123
  $region4: #{multi_head_attention.3} parent=0 // loop_header_branch
    %13 = sbr.rel (%p11) target = $region8
  $region5: #{multi_head_attention.3} parent=0 // loop_body
    %s15 = ssub.s32 %s10, 1
    %s16 = ssub.s32 %s10, 2
    %s17 = sadd.s32 %s10, 1
    %s18 = ssub.s32 %s10, %s17
    %p19 = scmp.eq.s32.totalorder %s18, 0
    %s21 = sadd.s32 %s20, 1
    %s22 = scalar_select %p19, %s20, %s21
    %p25 = pneg %p19
    %p26 = scmp.eq.s32.totalorder %s10, 1
    %p27 = por %p25, %p26
    %p28 = scmp.ne.s32.totalorder %s20, %s23
    %p29 = scmp.eq.s32.totalorder %s10, 0
    %p30 = por %p28, %p29
    %p31 = scmp.ne.s32.totalorder %s20, %s23
    %p32 = scmp.eq.s32.totalorder %s15, 1
    %p33 = por %p31, %p32
    %p34 = scmp.ne.s32.totalorder %s23, %s24
    %p35 = scmp.eq.s32.totalorder %s15, 0
    %p36 = por %p34, %p35
    %p37 = scmp.ne.s32.totalorder %s23, %s24
    %p38 = scmp.eq.s32.totalorder %s16, 1
    %p39 = por %p37, %p38
    %p41 = scmp.ne.s32.totalorder %s24, %s40
    %p42 = scmp.eq.s32.totalorder %s16, 0
    %p43 = por %p41, %p42
    %s44 = ssub.s32 %s10, %s17
    %p45 = scmp.eq.s32.totalorder %s44, 0
    %s47 = sadd.s32 %s46, 1
    %s48 = scalar_select %p45, %s46, %s47
    %p51 = pneg %p45
    %p52 = scmp.eq.s32.totalorder %s10, 1
    %p53 = por %p51, %p52
    %p54 = scmp.ne.s32.totalorder %s46, %s49
    %p55 = scmp.eq.s32.totalorder %s10, 0
    %p56 = por %p54, %p55
    %p57 = scmp.ne.s32.totalorder %s46, %s49
    %p58 = scmp.eq.s32.totalorder %s15, 1
    %p59 = por %p57, %p58
    %p60 = scmp.ne.s32.totalorder %s49, %s50
    %p61 = scmp.eq.s32.totalorder %s15, 0
    %p62 = por %p60, %p61
    %p63 = scmp.ne.s32.totalorder %s49, %s50
    %p64 = scmp.eq.s32.totalorder %s16, 1
    %p65 = por %p63, %p64
    %p67 = scmp.ne.s32.totalorder %s50, %s66
    %p68 = scmp.eq.s32.totalorder %s16, 0
    %p69 = por %p67, %p68
    %s70 = ssub.s32 %s10, %s17
    %p71 = scmp.eq.s32.totalorder %s70, 0
    %s73 = sadd.s32 %s72, 1
    %s74 = scalar_select %p71, %s72, %s73
    %p77 = pneg %p71
    %p78 = scmp.eq.s32.totalorder %s10, 1
    %p79 = por %p77, %p78
    %p80 = scmp.ne.s32.totalorder %s72, %s75
    %p81 = scmp.eq.s32.totalorder %s10, 0
    %p82 = por %p80, %p81
    %p83 = scmp.ne.s32.totalorder %s72, %s75
    %p84 = scmp.eq.s32.totalorder %s15, 1
    %p85 = por %p83, %p84
    %p86 = scmp.ne.s32.totalorder %s75, %s76
    %p87 = scmp.eq.s32.totalorder %s15, 0
    %p88 = por %p86, %p87
    %p89 = scmp.ne.s32.totalorder %s75, %s76
    %p90 = scmp.eq.s32.totalorder %s16, 1
    %p91 = por %p89, %p90
    %p93 = scmp.ne.s32.totalorder %s76, %s92
    %p94 = scmp.eq.s32.totalorder %s16, 0
    %p95 = por %p93, %p94
    %s97 = sadd.s32 %s96, 1
    %p100 = scmp.eq.s32.totalorder %s10, 1
    %p101 = scmp.ne.s32.totalorder %s96, %s98
    %p102 = scmp.eq.s32.totalorder %s10, 0
    %p103 = por %p101, %p102
    %p104 = scmp.ne.s32.totalorder %s96, %s98
    %p105 = scmp.eq.s32.totalorder %s15, 1
    %p106 = por %p104, %p105
    %p107 = scmp.ne.s32.totalorder %s98, %s99
    %p108 = scmp.eq.s32.totalorder %s15, 0
    %p109 = por %p107, %p108
    %p110 = scmp.ne.s32.totalorder %s98, %s99
    %p111 = scmp.eq.s32.totalorder %s16, 1
    %p112 = por %p110, %p111
    %p114 = scmp.ne.s32.totalorder %s99, %s113
    %p115 = scmp.eq.s32.totalorder %s16, 0
    %p116 = por %p114, %p115
    %s117 = ssub.s32 %s10, %s17
    %p118 = scmp.eq.s32.totalorder %s117, 0
    %s120 = sadd.s32 %s119, 1
    %s121 = scalar_select %p118, %s119, %s120
    %p124 = pneg %p118
    %p125 = scmp.eq.s32.totalorder %s10, 1
    %p126 = por %p124, %p125
    %p127 = scmp.ne.s32.totalorder %s119, %s122
    %p128 = scmp.eq.s32.totalorder %s10, 0
    %p129 = por %p127, %p128
    %p130 = scmp.ne.s32.totalorder %s119, %s122
    %p131 = scmp.eq.s32.totalorder %s15, 1
    %p132 = por %p130, %p131
    %p133 = scmp.ne.s32.totalorder %s122, %s123
    %p134 = scmp.eq.s32.totalorder %s15, 0
    %p135 = por %p133, %p134
    %p136 = scmp.ne.s32.totalorder %s122, %s123
    %p137 = scmp.eq.s32.totalorder %s16, 1
    %p138 = por %p136, %p137
    %p140 = scmp.ne.s32.totalorder %s123, %s139
    %p141 = scmp.eq.s32.totalorder %s16, 0
    %p142 = por %p140, %p141
    %p143 = scmp.le.s32.totalorder 1, %s10
    %p144 = scmp.lt.s32.totalorder %s10, 3
    %p145 = pnand %p143, %p144
    %p146 = pneg %p145
    // Predicated region
    $region9: #{multi_head_attention.3} parent=5 // pred_check
      _
    $region10: #{multi_head_attention.3} parent=5 // pred_check_branch
      %148 = sbr.rel (%p145) target = $region12
    $region11: #{multi_head_attention.3} parent=5 // pred_region
      %s149 = ssub.s32 %s10, 1
      // Predicated region
      $region13: #{multi_head_attention.3} parent=11 // pred_check
        %p150 = pneg %p109
      $region14: #{multi_head_attention.3} parent=11 // pred_check_branch
        %152 = sbr.rel (%p150) target = $region16
      $region15: #{multi_head_attention.3} parent=11 // pred_region
        _
      $region16: #{multi_head_attention.3} parent=11 // pred_fallthru
        _
    $region12: #{multi_head_attention.3} parent=5 // pred_fallthru
      _
    %p153 = scmp.lt.s32.totalorder %s10, 2
    // Predicated region
    $region17: #{multi_head_attention.3} parent=5 // pred_check
      %p154 = pneg %p153
    $region18: #{multi_head_attention.3} parent=5 // pred_check_branch
      %156 = sbr.rel (%p154) target = $region20
    $region19: #{multi_head_attention.3} parent=5 // pred_region
      // Predicated region
      $region21: #{multi_head_attention.3} parent=19 // pred_check
        %p157 = pneg %p30
      $region22: #{multi_head_attention.3} parent=19 // pred_check_branch
        %159 = sbr.rel (%p157) target = $region24
      $region23: #{multi_head_attention.3} parent=19 // pred_region
        %p160 = scmp.lt.s32.totalorder %s10, 1
        %s161 = scalar_select %p160, %s10, 1
        %s162 = smul.addr %s161, 8
        %s163 = smul.addr %s162, 8
        %s164 = scalar_lea.vmem %s0, %s163
      $region24: #{multi_head_attention.3} parent=19 // pred_fallthru
        _
      // Predicated region
      $region25: #{multi_head_attention.3} parent=19 // pred_check
        %p165 = pneg %p56
      $region26: #{multi_head_attention.3} parent=19 // pred_check_branch
        %167 = sbr.rel (%p165) target = $region28
      $region27: #{multi_head_attention.3} parent=19 // pred_region
        %p168 = scmp.lt.s32.totalorder %s10, 1
        %s169 = scalar_select %p168, %s10, 1
        %s170 = smul.addr %s169, 2
        %s171 = smul.addr %s170, 8
        %s172 = scalar_lea.vmem %s1, %s171
      $region28: #{multi_head_attention.3} parent=19 // pred_fallthru
        _
      // Predicated region
      $region29: #{multi_head_attention.3} parent=19 // pred_check
        %p173 = pneg %p82
      $region30: #{multi_head_attention.3} parent=19 // pred_check_branch
        %175 = sbr.rel (%p173) target = $region32
      $region31: #{multi_head_attention.3} parent=19 // pred_region
        %p176 = scmp.lt.s32.totalorder %s10, 1
        %s177 = scalar_select %p176, %s10, 1
        %s178 = smul.addr %s177, 2
        %s179 = smul.addr %s178, 4
        %s180 = scalar_lea.vmem %s2, %s179
      $region32: #{multi_head_attention.3} parent=19 // pred_fallthru
        _
    $region20: #{multi_head_attention.3} parent=5 // pred_fallthru
      _
    %p181 = scmp.le.s32.totalorder 1, %s10
    %p182 = scmp.lt.s32.totalorder %s10, 3
    %p183 = pnand %p181, %p182
    %p184 = pneg %p183
    // Predicated region
    $region33: #{multi_head_attention.3} parent=5 // pred_check
      _
    $region34: #{multi_head_attention.3} parent=5 // pred_check_branch
      %186 = sbr.rel (%p183) target = $region36
    $region35: #{multi_head_attention.3} parent=5 // pred_region
      %s187 = ssub.s32 %s10, 1
      %p188 = scmp.lt.s32.totalorder %s15, 1
      %s189 = scalar_select %p188, %s15, 1
      %s190 = smul.addr %s189, 8
      %s191 = smul.addr %s190, 8
      %s192 = scalar_lea.vmem %s0, %s191
      %p193 = pneg %p36
      %p194 = pneg %p33
      %p195 = scmp.lt.s32.totalorder %s15, 1
      %s196 = scalar_select %p195, %s15, 1
      %s197 = smul.addr %s196, 2
      %s198 = smul.addr %s197, 8
      %s199 = scalar_lea.vmem %s1, %s198
      %p200 = pneg %p62
      %p201 = pneg %p59
      %p202 = scmp.lt.s32.totalorder %s15, 1
      %s203 = scalar_select %p202, %s15, 1
      %s204 = smul.addr %s203, 2
      %s205 = smul.addr %s204, 4
      %s206 = scalar_lea.vmem %s2, %s205
      %p207 = pneg %p88
      %p208 = pneg %p85
      %p209 = pneg %p109
      %p210 = pneg %p106
      %p211 = pneg %p135
      %p212 = pneg %p132
      %p213 = scmp.lt.s32.totalorder %s15, 1
      %s214 = scalar_select %p213, %s15, 1
      %s215 = smul.addr %s214, 4
      %s216 = smul.addr %s215, 4
      %s217 = scalar_lea.vmem %s4, %s216
      %p218 = scmp.lt.s32.totalorder %s15, 1
      %s219 = scalar_select %p218, %s15, 1
      %s220 = smul.addr %s219, 8
      %s221 = smul.addr %s220, 8
      %s222 = scalar_lea.vmem %s0, %s221
      %p223 = scmp.lt.s32.totalorder %s15, 1
      %s224 = scalar_select %p223, %s15, 1
      %s225 = smul.addr %s224, 2
      %s226 = smul.addr %s225, 8
      %s227 = scalar_lea.vmem %s1, %s226
      %p228 = scmp.lt.s32.totalorder %s15, 1
      %s229 = scalar_select %p228, %s15, 1
      %s230 = smul.addr %s229, 2
      %s231 = smul.addr %s230, 4
      %s232 = scalar_lea.vmem %s2, %s231
      %p233 = scmp.lt.s32.totalorder %s15, 1
      %s234 = scalar_select %p233, %s15, 1
      %s235 = smul.addr %s234, 4
      %s236 = smul.addr %s235, 4
      %s237 = scalar_lea.vmem %s4, %s236
      %v238 = vld [vmem:[%s3] sm:$0xff]
      %v239 = vld [vmem:[%s3 + $0x8] sm:$0xff]
      %v240 = vld [vmem:[%s3 + $0x10] sm:$0xff]
      %v241 = vld [vmem:[%s3 + $0x18] sm:$0xff]
      %v242 = vld [vmem:[%s3 + $0x20] sm:$0xff]
      %v243 = vld [vmem:[%s3 + $0x28] sm:$0xff]
      %v244 = vld [vmem:[%s3 + $0x30] sm:$0xff]
      %v245 = vld [vmem:[%s3 + $0x38] sm:$0xff]
      %v246 = vld [vmem:[%s222] sm:$0xff]
      %v247 = vld [vmem:[%s222 + $0x8] sm:$0xff]
      %v248 = vld [vmem:[%s222 + $0x10] sm:$0xff]
      %v249 = vld [vmem:[%s222 + $0x18] sm:$0xff]
      %v250 = vld [vmem:[%s227] sm:$0xff]
      %v251 = vld [vmem:[%s232] sm:$0xf]
      %vm252 = vcmask 64512
      %v254 = vsel %vm252, %v246, 0
      %v257 = vsel %vm252, %v247, 0
      %v260 = vsel %vm252, %v248, 0
      %v263 = vsel %vm252, %v249, 0
      %265 = vmatprep.subr.mxu0 0.0
      %266 = vmatpush1.msra.mxu0 %v250
      %267 = vmatprep.subr.mxu0 0.0
      %268 = vmatpush1.msra.mxu0 0.0
      %269 = vmatprep.subr.mxu0 0.0
      %270 = vmatpush1.msra.mxu0 0.0
      %271 = vmatprep.subr.mxu0 0.0
      %272 = vmatpush1.msra.mxu0 0.0
      %273 = vmatprep.subr.mxu0 0.0
      %274 = vmatpush1.msra.mxu0 0.0
      %275 = vmatprep.subr.mxu0 0.0
      %276 = vmatpush1.msra.mxu0 0.0
      %277 = vmatprep.subr.mxu0 0.0
      %278 = vmatpush1.msra.mxu0 0.0
      %279 = vmatprep.subr.mxu0 0.0
      %280 = vmatpush1.msra.mxu0 0.0
      %281 = vmatprep.subr.mxu0 0.0
      %282 = vmatpush1.msra.mxu0 0.0
      %283 = vmatprep.subr.mxu0 0.0
      %284 = vmatpush1.msra.mxu0 0.0
      %285 = vmatprep.subr.mxu0 0.0
      %286 = vmatpush1.msra.mxu0 0.0
      %287 = vmatprep.subr.mxu0 0.0
      %288 = vmatpush1.msra.mxu0 0.0
      %289 = vmatprep.subr.mxu0 0.0
      %290 = vmatpush1.msra.mxu0 0.0
      %291 = vmatprep.subr.mxu0 0.0
      %292 = vmatpush1.msra.mxu0 0.0
      %293 = vmatprep.subr.mxu0 0.0
      %294 = vmatpush1.msra.mxu0 0.0
      %295 = vmatprep.subr.mxu0 0.0
      %296 = vmatpush1.msra.mxu0 0.0
      %297 = vmatprep.subr.mxu0 0.0
      %298 = vmatpush1.msra.mxu0 0.0
      %299 = vmatprep.subr.mxu0 0.0
      %300 = vmatpush1.msra.mxu0 0.0
      %301 = vmatprep.subr.mxu0 0.0
      %302 = vmatpush1.msra.mxu0 0.0
      %303 = vmatprep.subr.mxu0 0.0
      %304 = vmatpush1.msra.mxu0 0.0
      %305 = vmatprep.subr.mxu0 0.0
      %306 = vmatpush1.msra.mxu0 0.0
      %307 = vmatprep.subr.mxu0 0.0
      %308 = vmatpush1.msra.mxu0 0.0
      %309 = vmatprep.subr.mxu0 0.0
      %310 = vmatpush1.msra.mxu0 0.0
      %311 = vmatprep.subr.mxu0 0.0
      %312 = vmatpush1.msra.mxu0 0.0
      %313 = vmatprep.subr.mxu0 0.0
      %314 = vmatpush1.msra.mxu0 0.0
      %315 = vmatprep.subr.mxu0 0.0
      %316 = vmatpush1.msra.mxu0 0.0
      %317 = vmatprep.subr.mxu0 0.0
      %318 = vmatpush1.msra.mxu0 0.0
      %319 = vmatprep.subr.mxu0 0.0
      %320 = vmatpush1.msra.mxu0 0.0
      %321 = vmatprep.subr.mxu0 0.0
      %322 = vmatpush1.msra.mxu0 0.0
      %323 = vmatprep.subr.mxu0 0.0
      %324 = vmatpush1.msra.mxu0 0.0
      %325 = vmatprep.subr.mxu0 0.0
      %326 = vmatpush1.msra.mxu0 0.0
      %327 = vmatprep.subr.mxu0 0.0
      %328 = vmatpush1.msra.mxu0 0.0
      %329 = vmatprep.mubr.f32.mxu0 0.0
      %330 = vmatmul.mubr.f32.gmra.mrb[0].mxu0 %v254
      %v331 = vpop.f32.mrb[0].mxu0
      %v332 = vadd.f32 0.0, %v331
      %v333 = vpop.f32.mrb[0].mxu0
      %334 = vmatprep.mubr.f32.mxu0 0.0
      %335 = vmatmul.mubr.f32.gmra.mrb[0].mxu0 %v257
      %v336 = vpop.f32.mrb[0].mxu0
      %v337 = vadd.f32 0.0, %v336
      %v338 = vpop.f32.mrb[0].mxu0
      %339 = vmatprep.mubr.f32.mxu0 0.0
      %340 = vmatmul.mubr.f32.gmra.mrb[0].mxu0 %v260
      %v341 = vpop.f32.mrb[0].mxu0
      %v342 = vadd.f32 0.0, %v341
      %v343 = vpop.f32.mrb[0].mxu0
      %344 = vmatprep.mubr.f32.mxu0 0.0
      %345 = vmatmul.mubr.f32.gmra.mrb[0].mxu0 %v263
      %v346 = vpop.f32.mrb[0].mxu0
      %v347 = vadd.f32 0.0, %v346
      %v348 = vpop.f32.mrb[0].mxu0
      %349 = vdwg.mxu0
      %vm350 = vcmask 261120
      %v351 = vsel %vm350, %v332, -inf
      %352 = vmax.xlane.f32.xlu0 %v351
      %v353 = vpop.xlane.xlu0 %352
      %v354 = vsel %vm350, %v337, -inf
      %355 = vmax.xlane.f32.xlu0 %v354
      %v356 = vpop.xlane.xlu0 %355
      %v357 = vsel %vm350, %v342, -inf
      %358 = vmax.xlane.f32.xlu0 %v357
      %v359 = vpop.xlane.xlu0 %358
      %v360 = vsel %vm350, %v347, -inf
      %361 = vmax.xlane.f32.xlu0 %v360
      %v362 = vpop.xlane.xlu0 %361
      %v363 = vsub.f32 %v332, %v353
      %v364 = vsub.f32 %v337, %v356
      %v365 = vsub.f32 %v342, %v359
      %v366 = vsub.f32 %v347, %v362
      %v367 = vmul.f32 %v363, 1.442695
      %v368 = vpow.pop %v367
      %v369 = vmul.f32 %v364, 1.442695
      %v370 = vpow.pop %v369
      %v371 = vmul.f32 %v365, 1.442695
      %v372 = vpow.pop %v371
      %v373 = vmul.f32 %v366, 1.442695
      %v374 = vpow.pop %v373
      %v375 = vsel %vm350, %v368, 0.0
      %376 = vadd.xlane.f32.xlu0 %v375
      %v377 = vpop.xlane.xlu0 %376
      %v378 = vsel %vm350, %v370, 0.0
      %379 = vadd.xlane.f32.xlu0 %v378
      %v380 = vpop.xlane.xlu0 %379
      %v381 = vsel %vm350, %v372, 0.0
      %382 = vadd.xlane.f32.xlu0 %v381
      %v383 = vpop.xlane.xlu0 %382
      %v384 = vsel %vm350, %v374, 0.0
      %385 = vadd.xlane.f32.xlu0 %v384
      %v386 = vpop.xlane.xlu0 %385
      %v387 = vrcp.pop %v377
      %v388 = vrcp.pop %v380
      %v389 = vrcp.pop %v383
      %v390 = vrcp.pop %v386
      %v391 = vmul.f32 %v368, %v387
      %v392 = vmul.f32 %v370, %v388
      %v393 = vmul.f32 %v372, %v389
      %v394 = vmul.f32 %v374, %v390
      %v396 = vsel %vm350, %v251, 0
      %v399 = vsel %vm350, %v391, 0
      %v402 = vsel %vm350, %v392, 0
      %v405 = vsel %vm350, %v393, 0
      %v408 = vsel %vm350, %v394, 0
      %410 = vmatprep.subr.mxu0 0.0
      %411 = vmatpush1.xpose.msra.mxu0 %v399
      %412 = vmatprep.subr.mxu0 0.0
      %413 = vmatpush1.xpose.msra.mxu0 %v402
      %414 = vmatprep.subr.mxu0 0.0
      %415 = vmatpush1.xpose.msra.mxu0 %v405
      %416 = vmatprep.subr.mxu0 0.0
      %417 = vmatpush1.xpose.msra.mxu0 %v408
      %418 = vmatprep.subr.mxu0 0.0
      %419 = vmatpush1.xpose.msra.mxu0 0.0
      %420 = vmatprep.subr.mxu0 0.0
      %421 = vmatpush1.xpose.msra.mxu0 0.0
      %422 = vmatprep.subr.mxu0 0.0
      %423 = vmatpush1.xpose.msra.mxu0 0.0
      %424 = vmatprep.subr.mxu0 0.0
      %425 = vmatpush1.xpose.msra.mxu0 0.0
      %426 = vmatprep.subr.mxu0 0.0
      %427 = vmatpush1.xpose.msra.mxu0 0.0
      %428 = vmatprep.subr.mxu0 0.0
      %429 = vmatpush1.xpose.msra.mxu0 0.0
      %430 = vmatprep.subr.mxu0 0.0
      %431 = vmatpush1.xpose.msra.mxu0 0.0
      %432 = vmatprep.subr.mxu0 0.0
      %433 = vmatpush1.xpose.msra.mxu0 0.0
      %434 = vmatprep.subr.mxu0 0.0
      %435 = vmatpush1.xpose.msra.mxu0 0.0
      %436 = vmatprep.subr.mxu0 0.0
      %437 = vmatpush1.xpose.msra.mxu0 0.0
      %438 = vmatprep.subr.mxu0 0.0
      %439 = vmatpush1.xpose.msra.mxu0 0.0
      %440 = vmatprep.subr.mxu0 0.0
      %441 = vmatpush1.xpose.msra.mxu0 0.0
      %442 = vmatprep.subr.mxu0 0.0
      %443 = vmatpush1.xpose.msra.mxu0 0.0
      %444 = vmatprep.subr.mxu0 0.0
      %445 = vmatpush1.xpose.msra.mxu0 0.0
      %446 = vmatprep.subr.mxu0 0.0
      %447 = vmatpush1.xpose.msra.mxu0 0.0
      %448 = vmatprep.subr.mxu0 0.0
      %449 = vmatpush1.xpose.msra.mxu0 0.0
      %450 = vmatprep.subr.mxu0 0.0
      %451 = vmatpush1.xpose.msra.mxu0 0.0
      %452 = vmatprep.subr.mxu0 0.0
      %453 = vmatpush1.xpose.msra.mxu0 0.0
      %454 = vmatprep.subr.mxu0 0.0
      %455 = vmatpush1.xpose.msra.mxu0 0.0
      %456 = vmatprep.subr.mxu0 0.0
      %457 = vmatpush1.xpose.msra.mxu0 0.0
      %458 = vmatprep.subr.mxu0 0.0
      %459 = vmatpush1.xpose.msra.mxu0 0.0
      %460 = vmatprep.subr.mxu0 0.0
      %461 = vmatpush1.xpose.msra.mxu0 0.0
      %462 = vmatprep.subr.mxu0 0.0
      %463 = vmatpush1.xpose.msra.mxu0 0.0
      %464 = vmatprep.subr.mxu0 0.0
      %465 = vmatpush1.xpose.msra.mxu0 0.0
      %466 = vmatprep.subr.mxu0 0.0
      %467 = vmatpush1.xpose.msra.mxu0 0.0
      %468 = vmatprep.subr.mxu0 0.0
      %469 = vmatpush1.xpose.msra.mxu0 0.0
      %470 = vmatprep.subr.mxu0 0.0
      %471 = vmatpush1.xpose.msra.mxu0 0.0
      %472 = vmatprep.subr.mxu0 0.0
      %473 = vmatpush1.xpose.msra.mxu0 0.0
      %474 = vmatprep.mubr.f32.mxu0 0.0
      %475 = vmatmul.mubr.f32.gmra.mrb[0].mxu0 %v396
      %v476 = vpop.f32.mrb[0].mxu0
      %v477 = vadd.f32 0.0, %v476
      %v478 = vpop.f32.mrb[0].mxu0
      %479 = vdwg.mxu0
      %v480 = vmul.f32 %v477, 0.35355338
      %v482 = vsel %vm350, %v480, 0
      %484 = vmatprep.subr.mxu0 %v239
      %485 = vmatpush1.msra.mxu0 %v238
      %486 = vmatprep.subr.mxu0 %v241
      %487 = vmatpush1.msra.mxu0 %v240
      %488 = vmatprep.subr.mxu0 %v243
      %489 = vmatpush1.msra.mxu0 %v242
      %490 = vmatprep.subr.mxu0 %v245
      %491 = vmatpush1.msra.mxu0 %v244
      %492 = vmatprep.subr.mxu0 0.0
      %493 = vmatpush1.msra.mxu0 0.0
      %494 = vmatprep.subr.mxu0 0.0
      %495 = vmatpush1.msra.mxu0 0.0
      %496 = vmatprep.subr.mxu0 0.0
      %497 = vmatpush1.msra.mxu0 0.0
      %498 = vmatprep.subr.mxu0 0.0
      %499 = vmatpush1.msra.mxu0 0.0
      %500 = vmatprep.subr.mxu0 0.0
      %501 = vmatpush1.msra.mxu0 0.0
      %502 = vmatprep.subr.mxu0 0.0
      %503 = vmatpush1.msra.mxu0 0.0
      %504 = vmatprep.subr.mxu0 0.0
      %505 = vmatpush1.msra.mxu0 0.0
      %506 = vmatprep.subr.mxu0 0.0
      %507 = vmatpush1.msra.mxu0 0.0
      %508 = vmatprep.subr.mxu0 0.0
      %509 = vmatpush1.msra.mxu0 0.0
      %510 = vmatprep.subr.mxu0 0.0
      %511 = vmatpush1.msra.mxu0 0.0
      %512 = vmatprep.subr.mxu0 0.0
      %513 = vmatpush1.msra.mxu0 0.0
      %514 = vmatprep.subr.mxu0 0.0
      %515 = vmatpush1.msra.mxu0 0.0
      %516 = vmatprep.subr.mxu0 0.0
      %517 = vmatpush1.msra.mxu0 0.0
      %518 = vmatprep.subr.mxu0 0.0
      %519 = vmatpush1.msra.mxu0 0.0
      %520 = vmatprep.subr.mxu0 0.0
      %521 = vmatpush1.msra.mxu0 0.0
      %522 = vmatprep.subr.mxu0 0.0
      %523 = vmatpush1.msra.mxu0 0.0
      %524 = vmatprep.subr.mxu0 0.0
      %525 = vmatpush1.msra.mxu0 0.0
      %526 = vmatprep.subr.mxu0 0.0
      %527 = vmatpush1.msra.mxu0 0.0
      %528 = vmatprep.subr.mxu0 0.0
      %529 = vmatpush1.msra.mxu0 0.0
      %530 = vmatprep.subr.mxu0 0.0
      %531 = vmatpush1.msra.mxu0 0.0
      %532 = vmatprep.subr.mxu0 0.0
      %533 = vmatpush1.msra.mxu0 0.0
      %534 = vmatprep.subr.mxu0 0.0
      %535 = vmatpush1.msra.mxu0 0.0
      %536 = vmatprep.subr.mxu0 0.0
      %537 = vmatpush1.msra.mxu0 0.0
      %538 = vmatprep.subr.mxu0 0.0
      %539 = vmatpush1.msra.mxu0 0.0
      %540 = vmatprep.subr.mxu0 0.0
      %541 = vmatpush1.msra.mxu0 0.0
      %542 = vmatprep.subr.mxu0 0.0
      %543 = vmatpush1.msra.mxu0 0.0
      %544 = vmatprep.subr.mxu0 0.0
      %545 = vmatpush1.msra.mxu0 0.0
      %546 = vmatprep.subr.mxu0 0.0
      %547 = vmatpush1.msra.mxu0 0.0
      %548 = vmatprep.mubr.f32.mxu0 0.0
      %549 = vmatmul.mubr.f32.gmra.mrb[0].mxu0 %v482
      %v550 = vpop.f32.mrb[0].mxu0
      %v551 = vadd.f32 0.0, %v550
      %v552 = vpop.f32.mrb[0].mxu0
      %v553 = vadd.f32 0.0, %v552
      %554 = vdwg.mxu0
      %v557 = vcombine.low %v551, %v553
      %559 = vst [vmem:[%s237] sm:$0xff] %v557
      %s560 = scalar_lea.vmem %s222, 32
      %v561 = vld [vmem:[%s560] sm:$0xff]
      %v562 = vld [vmem:[%s560 + $0x8] sm:$0xff]
      %v563 = vld [vmem:[%s560 + $0x10] sm:$0xff]
      %v564 = vld [vmem:[%s560 + $0x18] sm:$0xff]
      %s565 = scalar_lea.vmem %s227, 8
      %v566 = vld [vmem:[%s565] sm:$0xff]
      %s567 = scalar_lea.vmem %s232, 4
      %v568 = vld [vmem:[%s567] sm:$0xf]
      %v570 = vsel %vm252, %v561, 0
      %v573 = vsel %vm252, %v562, 0
      %v576 = vsel %vm252, %v563, 0
      %v579 = vsel %vm252, %v564, 0
      %581 = vmatprep.subr.mxu0 0.0
      %582 = vmatpush1.msra.mxu0 %v566
      %583 = vmatprep.subr.mxu0 0.0
      %584 = vmatpush1.msra.mxu0 0.0
      %585 = vmatprep.subr.mxu0 0.0
      %586 = vmatpush1.msra.mxu0 0.0
      %587 = vmatprep.subr.mxu0 0.0
      %588 = vmatpush1.msra.mxu0 0.0
      %589 = vmatprep.subr.mxu0 0.0
      %590 = vmatpush1.msra.mxu0 0.0
      %591 = vmatprep.subr.mxu0 0.0
      %592 = vmatpush1.msra.mxu0 0.0
      %593 = vmatprep.subr.mxu0 0.0
      %594 = vmatpush1.msra.mxu0 0.0
      %595 = vmatprep.subr.mxu0 0.0
      %596 = vmatpush1.msra.mxu0 0.0
      %597 = vmatprep.subr.mxu0 0.0
      %598 = vmatpush1.msra.mxu0 0.0
      %599 = vmatprep.subr.mxu0 0.0
      %600 = vmatpush1.msra.mxu0 0.0
      %601 = vmatprep.subr.mxu0 0.0
      %602 = vmatpush1.msra.mxu0 0.0
      %603 = vmatprep.subr.mxu0 0.0
      %604 = vmatpush1.msra.mxu0 0.0
      %605 = vmatprep.subr.mxu0 0.0
      %606 = vmatpush1.msra.mxu0 0.0
      %607 = vmatprep.subr.mxu0 0.0
      %608 = vmatpush1.msra.mxu0 0.0
      %609 = vmatprep.subr.mxu0 0.0
      %610 = vmatpush1.msra.mxu0 0.0
      %611 = vmatprep.subr.mxu0 0.0
      %612 = vmatpush1.msra.mxu0 0.0
      %613 = vmatprep.subr.mxu0 0.0
      %614 = vmatpush1.msra.mxu0 0.0
      %615 = vmatprep.subr.mxu0 0.0
      %616 = vmatpush1.msra.mxu0 0.0
      %617 = vmatprep.subr.mxu0 0.0
      %618 = vmatpush1.msra.mxu0 0.0
      %619 = vmatprep.subr.mxu0 0.0
      %620 = vmatpush1.msra.mxu0 0.0
      %621 = vmatprep.subr.mxu0 0.0
      %622 = vmatpush1.msra.mxu0 0.0
      %623 = vmatprep.subr.mxu0 0.0
      %624 = vmatpush1.msra.mxu0 0.0
      %625 = vmatprep.subr.mxu0 0.0
      %626 = vmatpush1.msra.mxu0 0.0
      %627 = vmatprep.subr.mxu0 0.0
      %628 = vmatpush1.msra.mxu0 0.0
      %629 = vmatprep.subr.mxu0 0.0
      %630 = vmatpush1.msra.mxu0 0.0
      %631 = vmatprep.subr.mxu0 0.0
      %632 = vmatpush1.msra.mxu0 0.0
      %633 = vmatprep.subr.mxu0 0.0
      %634 = vmatpush1.msra.mxu0 0.0
      %635 = vmatprep.subr.mxu0 0.0
      %636 = vmatpush1.msra.mxu0 0.0
      %637 = vmatprep.subr.mxu0 0.0
      %638 = vmatpush1.msra.mxu0 0.0
      %639 = vmatprep.subr.mxu0 0.0
      %640 = vmatpush1.msra.mxu0 0.0
      %641 = vmatprep.subr.mxu0 0.0
      %642 = vmatpush1.msra.mxu0 0.0
      %643 = vmatprep.subr.mxu0 0.0
      %644 = vmatpush1.msra.mxu0 0.0
      %645 = vmatprep.mubr.f32.mxu0 0.0
      %646 = vmatmul.mubr.f32.gmra.mrb[0].mxu0 %v570
      %v647 = vpop.f32.mrb[0].mxu0
      %v648 = vadd.f32 0.0, %v647
      %v649 = vpop.f32.mrb[0].mxu0
      %650 = vmatprep.mubr.f32.mxu0 0.0
      %651 = vmatmul.mubr.f32.gmra.mrb[0].mxu0 %v573
      %v652 = vpop.f32.mrb[0].mxu0
      %v653 = vadd.f32 0.0, %v652
      %v654 = vpop.f32.mrb[0].mxu0
      %655 = vmatprep.mubr.f32.mxu0 0.0
      %656 = vmatmul.mubr.f32.gmra.mrb[0].mxu0 %v576
      %v657 = vpop.f32.mrb[0].mxu0
      %v658 = vadd.f32 0.0, %v657
      %v659 = vpop.f32.mrb[0].mxu0
      %660 = vmatprep.mubr.f32.mxu0 0.0
      %661 = vmatmul.mubr.f32.gmra.mrb[0].mxu0 %v579
      %v662 = vpop.f32.mrb[0].mxu0
      %v663 = vadd.f32 0.0, %v662
      %v664 = vpop.f32.mrb[0].mxu0
      %665 = vdwg.mxu0
      %v666 = vsel %vm350, %v648, -inf
      %667 = vmax.xlane.f32.xlu0 %v666
      %v668 = vpop.xlane.xlu0 %667
      %v669 = vsel %vm350, %v653, -inf
      %670 = vmax.xlane.f32.xlu0 %v669
      %v671 = vpop.xlane.xlu0 %670
      %v672 = vsel %vm350, %v658, -inf
      %673 = vmax.xlane.f32.xlu0 %v672
      %v674 = vpop.xlane.xlu0 %673
      %v675 = vsel %vm350, %v663, -inf
      %676 = vmax.xlane.f32.xlu0 %v675
      %v677 = vpop.xlane.xlu0 %676
      %v678 = vsub.f32 %v648, %v668
      %v679 = vsub.f32 %v653, %v671
      %v680 = vsub.f32 %v658, %v674
      %v681 = vsub.f32 %v663, %v677
      %v682 = vmul.f32 %v678, 1.442695
      %v683 = vpow.pop %v682
      %v684 = vmul.f32 %v679, 1.442695
      %v685 = vpow.pop %v684
      %v686 = vmul.f32 %v680, 1.442695
      %v687 = vpow.pop %v686
      %v688 = vmul.f32 %v681, 1.442695
      %v689 = vpow.pop %v688
      %v690 = vsel %vm350, %v683, 0.0
      %691 = vadd.xlane.f32.xlu0 %v690
      %v692 = vpop.xlane.xlu0 %691
      %v693 = vsel %vm350, %v685, 0.0
      %694 = vadd.xlane.f32.xlu0 %v693
      %v695 = vpop.xlane.xlu0 %694
      %v696 = vsel %vm350, %v687, 0.0
      %697 = vadd.xlane.f32.xlu0 %v696
      %v698 = vpop.xlane.xlu0 %697
      %v699 = vsel %vm350, %v689, 0.0
      %700 = vadd.xlane.f32.xlu0 %v699
      %v701 = vpop.xlane.xlu0 %700
      %v702 = vrcp.pop %v692
      %v703 = vrcp.pop %v695
      %v704 = vrcp.pop %v698
      %v705 = vrcp.pop %v701
      %v706 = vmul.f32 %v683, %v702
      %v707 = vmul.f32 %v685, %v703
      %v708 = vmul.f32 %v687, %v704
      %v709 = vmul.f32 %v689, %v705
      %v711 = vsel %vm350, %v568, 0
      %v714 = vsel %vm350, %v706, 0
      %v717 = vsel %vm350, %v707, 0
      %v720 = vsel %vm350, %v708, 0
      %v723 = vsel %vm350, %v709, 0
      %725 = vmatprep.subr.mxu0 0.0
      %726 = vmatpush1.xpose.msra.mxu0 %v714
      %727 = vmatprep.subr.mxu0 0.0
      %728 = vmatpush1.xpose.msra.mxu0 %v717
      %729 = vmatprep.subr.mxu0 0.0
      %730 = vmatpush1.xpose.msra.mxu0 %v720
      %731 = vmatprep.subr.mxu0 0.0
      %732 = vmatpush1.xpose.msra.mxu0 %v723
      %733 = vmatprep.subr.mxu0 0.0
      %734 = vmatpush1.xpose.msra.mxu0 0.0
      %735 = vmatprep.subr.mxu0 0.0
      %736 = vmatpush1.xpose.msra.mxu0 0.0
      %737 = vmatprep.subr.mxu0 0.0
      %738 = vmatpush1.xpose.msra.mxu0 0.0
      %739 = vmatprep.subr.mxu0 0.0
      %740 = vmatpush1.xpose.msra.mxu0 0.0
      %741 = vmatprep.subr.mxu0 0.0
      %742 = vmatpush1.xpose.msra.mxu0 0.0
      %743 = vmatprep.subr.mxu0 0.0
      %744 = vmatpush1.xpose.msra.mxu0 0.0
      %745 = vmatprep.subr.mxu0 0.0
      %746 = vmatpush1.xpose.msra.mxu0 0.0
      %747 = vmatprep.subr.mxu0 0.0
      %748 = vmatpush1.xpose.msra.mxu0 0.0
      %749 = vmatprep.subr.mxu0 0.0
      %750 = vmatpush1.xpose.msra.mxu0 0.0
      %751 = vmatprep.subr.mxu0 0.0
      %752 = vmatpush1.xpose.msra.mxu0 0.0
      %753 = vmatprep.subr.mxu0 0.0
      %754 = vmatpush1.xpose.msra.mxu0 0.0
      %755 = vmatprep.subr.mxu0 0.0
      %756 = vmatpush1.xpose.msra.mxu0 0.0
      %757 = vmatprep.subr.mxu0 0.0
      %758 = vmatpush1.xpose.msra.mxu0 0.0
      %759 = vmatprep.subr.mxu0 0.0
      %760 = vmatpush1.xpose.msra.mxu0 0.0
      %761 = vmatprep.subr.mxu0 0.0
      %762 = vmatpush1.xpose.msra.mxu0 0.0
      %763 = vmatprep.subr.mxu0 0.0
      %764 = vmatpush1.xpose.msra.mxu0 0.0
      %765 = vmatprep.subr.mxu0 0.0
      %766 = vmatpush1.xpose.msra.mxu0 0.0
      %767 = vmatprep.subr.mxu0 0.0
      %768 = vmatpush1.xpose.msra.mxu0 0.0
      %769 = vmatprep.subr.mxu0 0.0
      %770 = vmatpush1.xpose.msra.mxu0 0.0
      %771 = vmatprep.subr.mxu0 0.0
      %772 = vmatpush1.xpose.msra.mxu0 0.0
      %773 = vmatprep.subr.mxu0 0.0
      %774 = vmatpush1.xpose.msra.mxu0 0.0
      %775 = vmatprep.subr.mxu0 0.0
      %776 = vmatpush1.xpose.msra.mxu0 0.0
      %777 = vmatprep.subr.mxu0 0.0
      %778 = vmatpush1.xpose.msra.mxu0 0.0
      %779 = vmatprep.subr.mxu0 0.0
      %780 = vmatpush1.xpose.msra.mxu0 0.0
      %781 = vmatprep.subr.mxu0 0.0
      %782 = vmatpush1.xpose.msra.mxu0 0.0
      %783 = vmatprep.subr.mxu0 0.0
      %784 = vmatpush1.xpose.msra.mxu0 0.0
      %785 = vmatprep.subr.mxu0 0.0
      %786 = vmatpush1.xpose.msra.mxu0 0.0
      %787 = vmatprep.subr.mxu0 0.0
      %788 = vmatpush1.xpose.msra.mxu0 0.0
      %789 = vmatprep.mubr.f32.mxu0 0.0
      %790 = vmatmul.mubr.f32.gmra.mrb[0].mxu0 %v711
      %v791 = vpop.f32.mrb[0].mxu0
      %v792 = vadd.f32 0.0, %v791
      %v793 = vpop.f32.mrb[0].mxu0
      %794 = vdwg.mxu0
      %v795 = vmul.f32 %v792, 0.35355338
      %v797 = vsel %vm350, %v795, 0
      %799 = vmatprep.subr.mxu0 %v239
      %800 = vmatpush1.msra.mxu0 %v238
      %801 = vmatprep.subr.mxu0 %v241
      %802 = vmatpush1.msra.mxu0 %v240
      %803 = vmatprep.subr.mxu0 %v243
      %804 = vmatpush1.msra.mxu0 %v242
      %805 = vmatprep.subr.mxu0 %v245
      %806 = vmatpush1.msra.mxu0 %v244
      %807 = vmatprep.subr.mxu0 0.0
      %808 = vmatpush1.msra.mxu0 0.0
      %809 = vmatprep.subr.mxu0 0.0
      %810 = vmatpush1.msra.mxu0 0.0
      %811 = vmatprep.subr.mxu0 0.0
      %812 = vmatpush1.msra.mxu0 0.0
      %813 = vmatprep.subr.mxu0 0.0
      %814 = vmatpush1.msra.mxu0 0.0
      %815 = vmatprep.subr.mxu0 0.0
      %816 = vmatpush1.msra.mxu0 0.0
      %817 = vmatprep.subr.mxu0 0.0
      %818 = vmatpush1.msra.mxu0 0.0
      %819 = vmatprep.subr.mxu0 0.0
      %820 = vmatpush1.msra.mxu0 0.0
      %821 = vmatprep.subr.mxu0 0.0
      %822 = vmatpush1.msra.mxu0 0.0
      %823 = vmatprep.subr.mxu0 0.0
      %824 = vmatpush1.msra.mxu0 0.0
      %825 = vmatprep.subr.mxu0 0.0
      %826 = vmatpush1.msra.mxu0 0.0
      %827 = vmatprep.subr.mxu0 0.0
      %828 = vmatpush1.msra.mxu0 0.0
      %829 = vmatprep.subr.mxu0 0.0
      %830 = vmatpush1.msra.mxu0 0.0
      %831 = vmatprep.subr.mxu0 0.0
      %832 = vmatpush1.msra.mxu0 0.0
      %833 = vmatprep.subr.mxu0 0.0
      %834 = vmatpush1.msra.mxu0 0.0
      %835 = vmatprep.subr.mxu0 0.0
      %836 = vmatpush1.msra.mxu0 0.0
      %837 = vmatprep.subr.mxu0 0.0
      %838 = vmatpush1.msra.mxu0 0.0
      %839 = vmatprep.subr.mxu0 0.0
      %840 = vmatpush1.msra.mxu0 0.0
      %841 = vmatprep.subr.mxu0 0.0
      %842 = vmatpush1.msra.mxu0 0.0
      %843 = vmatprep.subr.mxu0 0.0
      %844 = vmatpush1.msra.mxu0 0.0
      %845 = vmatprep.subr.mxu0 0.0
      %846 = vmatpush1.msra.mxu0 0.0
      %847 = vmatprep.subr.mxu0 0.0
      %848 = vmatpush1.msra.mxu0 0.0
      %849 = vmatprep.subr.mxu0 0.0
      %850 = vmatpush1.msra.mxu0 0.0
      %851 = vmatprep.subr.mxu0 0.0
      %852 = vmatpush1.msra.mxu0 0.0
      %853 = vmatprep.subr.mxu0 0.0
      %854 = vmatpush1.msra.mxu0 0.0
      %855 = vmatprep.subr.mxu0 0.0
      %856 = vmatpush1.msra.mxu0 0.0
      %857 = vmatprep.subr.mxu0 0.0
      %858 = vmatpush1.msra.mxu0 0.0
      %859 = vmatprep.subr.mxu0 0.0
      %860 = vmatpush1.msra.mxu0 0.0
      %861 = vmatprep.subr.mxu0 0.0
      %862 = vmatpush1.msra.mxu0 0.0
      %863 = vmatprep.mubr.f32.mxu0 0.0
      %864 = vmatmul.mubr.f32.gmra.mrb[0].mxu0 %v797
      %v865 = vpop.f32.mrb[0].mxu0
      %v866 = vadd.f32 0.0, %v865
      %v867 = vpop.f32.mrb[0].mxu0
      %v868 = vadd.f32 0.0, %v867
      %869 = vdwg.mxu0
      %v872 = vcombine.low %v866, %v868
      %s874 = scalar_lea.vmem %s237, 8
      %875 = vst [vmem:[%s874] sm:$0xff] %v872
      %p876 = scmp.lt.s32.totalorder %s15, 1
      %s877 = scalar_select %p876, %s15, 1
      %s878 = smul.addr %s877, 4
      %s879 = smul.addr %s878, 4
      %s880 = scalar_lea.vmem %s4, %s879
      // Predicated region
      $region37: #{multi_head_attention.3} parent=35 // pred_check
        %p881 = pneg %p132
      $region38: #{multi_head_attention.3} parent=35 // pred_check_branch
        %883 = sbr.rel (%p881) target = $region40
      $region39: #{multi_head_attention.3} parent=35 // pred_region
        _
      $region40: #{multi_head_attention.3} parent=35 // pred_fallthru
        _
    $region36: #{multi_head_attention.3} parent=5 // pred_fallthru
      _
    %p884 = scmp.le.s32.totalorder 2, %s10
    // Predicated region
    $region41: #{multi_head_attention.3} parent=5 // pred_check
      %p885 = pneg %p884
    $region42: #{multi_head_attention.3} parent=5 // pred_check_branch
      %887 = sbr.rel (%p885) target = $region44
    $region43: #{multi_head_attention.3} parent=5 // pred_region
      %s888 = ssub.s32 %s10, 2
      // Predicated region
      $region45: #{multi_head_attention.3} parent=43 // pred_check
        %p889 = pneg %p138
      $region46: #{multi_head_attention.3} parent=43 // pred_check_branch
        %891 = sbr.rel (%p889) target = $region48
      $region47: #{multi_head_attention.3} parent=43 // pred_region
        %p892 = scmp.lt.s32.totalorder %s16, 1
        %s893 = scalar_select %p892, %s16, 1
        %s894 = smul.addr %s893, 4
        %s895 = smul.addr %s894, 4
        %s896 = scalar_lea.vmem %s4, %s895
      $region48: #{multi_head_attention.3} parent=43 // pred_fallthru
        _
    $region44: #{multi_head_attention.3} parent=5 // pred_fallthru
      _
  $region6: #{multi_head_attention.3} parent=0 // loop_footer
    %s14 = sadd.s32 1, %s10
  $region7: #{multi_head_attention.3} parent=0 // loop_footer_branch
    %9 = sbr.rel target = $region3
  $region8: #{multi_head_attention.3} parent=0 // loop_exit
    _

</llo_original>
